<compile_context>
chip_gen: v7x
topology: tpu7x:2x2x1
jax: 0.10.0
libtpu: 0.0.40
codegen_flags: <defaults>
</compile_context>

<pallas_src>
from functools import partial

import jax
import jax.numpy as jnp
import numpy as np
from jax import lax
from jax.experimental import pallas as pl
from jax.experimental.pallas import tpu as pltpu

EPS = 1e-12  # matches torch.nn.functional.normalize default eps


def _clip_concept_kernel(x_ref, w_ref, *out_refs, n_protos, n_tok, emit_maps):
    # x_ref: (TB, S+1, D)  raw image features for TB images (CLS at position 0)
    # w_ref: (P_pad, D)    L2-normalized prototypes (zero rows beyond n_protos)
    # out_refs (maps on):  cos (TB,P,S), act (TB,P,S), mcos (TB,P,1), mact (TB,P,1)
    # out_refs (maps off): mcos (TB,P,1), mact (TB,P,1)
    if emit_maps:
        cos_ref, act_ref, mcos_ref, mact_ref = out_refs
    else:
        mcos_ref, mact_ref = out_refs

    wp = w_ref[...].astype(jnp.float32)                  # (P_pad, D), loop-invariant
    ones_row = jnp.ones((1, wp.shape[1]), jnp.float32)   # hoisted out of the loop

    @pl.loop(0, x_ref.shape[0])
    def _(i):
        # Drop the CLS token at the VMEM load (sublane offset 1) - no HBM pre-copy.
        x = x_ref[i, pl.ds(1, n_tok), :].astype(jnp.float32)        # (S, D)

        # project2basis, P-major (single NT MXU matmul): act[p, t] = w_hat[p].x[t]
        act_full = lax.dot_general(
            wp, x, (((1,), (1,)), ((), ())),
            preferred_element_type=jnp.float32,
            precision=lax.Precision.HIGHEST)                        # (P_pad, S)
        act = act_full[:n_protos]                                   # (P, S)

        # Per-token squared L2 norms as a (1, S) row (tokens on lanes): a tiny
        # M=1 MXU pass keeps the norms in the same orientation as `act`.
        nrm2 = lax.dot_general(
            ones_row, x * x, (((1,), (1,)), ((), ())),
            preferred_element_type=jnp.float32,
            precision=lax.Precision.HIGHEST)                        # (1, S)

        # F.normalize clamp: x / max(||x||, eps)  ==  x * rsqrt(max(||x||^2, eps^2))
        inv = lax.rsqrt(jnp.maximum(nrm2, EPS * EPS))               # (1, S)
        cos = act * inv                                             # cosine_conv2d tile

        if emit_maps:
            cos_ref[i] = cos                                        # final P-major layout
            act_ref[i] = act

        # adaptive_max_pool2d((1,1)): per-image max over tokens (lane reduce).
        mcos_ref[i] = jnp.max(cos, axis=1, keepdims=True)           # (P, 1)
        mact_ref[i] = jnp.max(act, axis=1, keepdims=True)           # (P, 1)


def _vmem_estimate(tb, s1, d, p_pad, p, s, emit_maps, in_bytes):
    """Rough per-grid-step VMEM footprint (bytes), double-buffered blocks."""
    x_in = 2 * tb * s1 * d * in_bytes
    protos = 2 * p_pad * d * 4
    maps = (2 * 2 * tb * p * s * 4) if emit_maps else 0
    maxes = 2 * 2 * tb * p * 4
    live = (s * d + p_pad * s + 2 * p * s) * 4     # x, act_full, act/cos values
    return x_in + protos + maps + maxes + 2 * live


def _pick_tb(B, s1, d, p_pad, p, s, emit_maps, in_bytes, budget=22 * 2**20):
    """Largest batch-block that fits the VMEM budget, keeping >=2 grid steps."""
    for tb in range(min(B, 8), 0, -1):
        if B % tb:
            continue
        if B > 1 and B // tb < 2:   # keep both v7x TensorCores busy
            continue
        if _vmem_estimate(tb, s1, d, p_pad, p, s, emit_maps, in_bytes) <= budget:
            return tb
    return 1


def clip_concept_forward(image_features, prototypes, fc_weight, w, h, *,
                         return_maps=True):
    """image_features: (B, S+1, D) CLIP encode_image output (CLS token first)
       prototypes:     (P, D, 1, 1)
       fc_weight:      (C, P)
    Returns (logits, max_cosine_sims, cosine_sims, activations) matching the
    PyTorch shapes: (B,C), (B,P), (B,P,h,w), (B,P,h,w)."""
    feats = image_features                      # CLS kept; dropped inside the kernel
    B, S1, D = feats.shape
    S = S1 - 1
    assert S == w * h, "token count must equal w*h"
    P = prototypes.shape[0]

    # Grid-invariant prototype normalization: once here (XLA), not per grid step.
    protos = prototypes.reshape(P, D).astype(jnp.float32)
    protos_hat = protos / jnp.maximum(
        jnp.sqrt(jnp.sum(protos * protos, axis=-1, keepdims=True)), EPS)
    P_pad = -(-P // 8) * 8                      # sublane-aligned matmul LHS
    if P_pad != P:
        protos_hat = jnp.concatenate(
            [protos_hat, jnp.zeros((P_pad - P, D), jnp.float32)], axis=0)

    in_bytes = feats.dtype.itemsize
    TB = _pick_tb(B, S1, D, P_pad, P, S, return_maps, in_bytes)
    est = _vmem_estimate(TB, S1, D, P_pad, P, S, return_maps, in_bytes)
    vmem_limit = None
    if est > 12 * 2**20:                        # above the tightest scoped default
        vmem_limit = int(min(max(2 * est, 32 * 2**20), 48 * 2**20))

    max_shapes = (jax.ShapeDtypeStruct((B, P, 1), jnp.float32),) * 2
    max_specs = (pl.BlockSpec((TB, P, 1), lambda bb: (bb, 0, 0)),) * 2
    if return_maps:
        out_shape = (jax.ShapeDtypeStruct((B, P, S), jnp.float32),) * 2 + max_shapes
        out_specs = (pl.BlockSpec((TB, P, S), lambda bb: (bb, 0, 0)),) * 2 + max_specs
    else:
        out_shape = max_shapes
        out_specs = max_specs

    outs = pl.pallas_call(
        partial(_clip_concept_kernel, n_protos=P, n_tok=S, emit_maps=return_maps),
        out_shape=out_shape,
        grid=(B // TB,),
        in_specs=[
            pl.BlockSpec((TB, S1, D), lambda bb: (bb, 0, 0)),   # raw features incl. CLS
            pl.BlockSpec((P_pad, D), lambda bb: (0, 0)),        # normalized prototypes
        ],
        out_specs=out_specs,
        compiler_params=pltpu.CompilerParams(
            dimension_semantics=("parallel",),
            vmem_limit_bytes=vmem_limit),
    )(feats, protos_hat)

    if return_maps:
        cos_pm, act_pm, mcos, mact = outs
        # Kernel emitted the conv-output layout: (B, P, S) -> (B, P, h, w) is a
        # free reshape (no transpose / HBM round trip).
        cosine_sims = cos_pm.reshape(B, P, h, w)
        activations = act_pm.reshape(B, P, h, w)
    else:
        mcos, mact = outs
        cosine_sims = activations = None

    max_cos = mcos[:, :, 0]                     # (B, P)
    # fc (Linear, no bias) over max-pooled activations: one tiny XLA matmul.
    logits = mact[:, :, 0] @ fc_weight.T        # (B, C)
    return logits, max_cos, cosine_sims, activations


def _reference(image_features, prototypes, fc_weight, w, h):
    """Plain-JAX reference mirroring the PyTorch forward."""
    x = image_features[:, 1:].astype(jnp.float32)             # (B, S, D)
    B, S, D = x.shape
    P = prototypes.shape[0]
    protos = prototypes.reshape(P, D).astype(jnp.float32)
    x_hat = x / jnp.maximum(jnp.linalg.norm(x, axis=-1, keepdims=True), EPS)
    w_hat = protos / jnp.maximum(jnp.linalg.norm(protos, axis=-1, keepdims=True), EPS)
    hp = lax.Precision.HIGHEST
    cos = jnp.einsum('bsd,pd->bsp', x_hat, w_hat, precision=hp)
    act = jnp.einsum('bsd,pd->bsp', x, w_hat, precision=hp)
    max_cos = jnp.max(cos, axis=1)
    logits = jnp.max(act, axis=1) @ fc_weight.T
    return (logits, max_cos,
            jnp.transpose(cos, (0, 2, 1)).reshape(B, P, h, w),
            jnp.transpose(act, (0, 2, 1)).reshape(B, P, h, w))


if __name__ == "__main__":
    # Small, deterministic configuration.
    B = 2            # batch
    D = 32           # CLIP visual output_dim (small stand-in)
    w = h = 4        # patches per side  (image_size // patch_size)
    S = w * h        # number of patch tokens
    num_classes = 8
    k = 3
    P = num_classes * k

    key = jax.random.PRNGKey(0)
    k_feat, k_proto = jax.random.split(key)

    # Stand-in for clip.encode_image(images, return_all=True, csa=True):
    # (B, S+1, D), CLS token at position 0.
    image_features = jax.random.normal(k_feat, (B, S + 1, D), dtype=jnp.float32)

    # Parameters (deterministic).
    prototypes = jax.random.normal(k_proto, (P, D, 1, 1), dtype=jnp.float32)
    # fc weight initialized with the _init_fc pattern (+1 own-class, -0.5 others)
    proto_class_identity = (jnp.arange(P) // k)[None, :] == jnp.arange(num_classes)[:, None]
    fc_weight = jnp.where(proto_class_identity, 1.0, -0.5).astype(jnp.float32)  # (C, P)

    outs = clip_concept_forward(image_features, prototypes, fc_weight, w, h)
    outs = jax.block_until_ready(outs)

    refs = _reference(image_features, prototypes, fc_weight, w, h)
    for o, r in zip(outs, refs):
        np.testing.assert_allclose(np.asarray(o), np.asarray(r), rtol=1e-5, atol=1e-5)

    # Maps-off fast path: only logits + max cosine sims (skips the big writebacks).
    lg2, mc2, _, _ = jax.block_until_ready(
        clip_concept_forward(image_features, prototypes, fc_weight, w, h,
                             return_maps=False))
    np.testing.assert_allclose(np.asarray(lg2), np.asarray(refs[0]), rtol=1e-5, atol=1e-5)
    np.testing.assert_allclose(np.asarray(mc2), np.asarray(refs[1]), rtol=1e-5, atol=1e-5)

    print("KERNEL_OK")
</pallas_src>

<mosaic_0001>
module attributes {stable_mosaic.version = 11 : i64} {
  func.func @_clip_concept_kernel(%arg0: i32, %arg1: memref<1x17x32xf32, #tpu.memory_space<vmem>>, %arg2: memref<24x32xf32, #tpu.memory_space<vmem>>, %arg3: memref<1x24x16xf32, #tpu.memory_space<vmem>>, %arg4: memref<1x24x16xf32, #tpu.memory_space<vmem>>, %arg5: memref<1x24x1xf32, #tpu.memory_space<vmem>>, %arg6: memref<1x24x1xf32, #tpu.memory_space<vmem>>) attributes {dimension_semantics = [#tpu.dimension_semantics<parallel>], iteration_bounds = array<i64: 2>, scalar_prefetch = 0 : i64, scratch_operands = 0 : i64, tpu.core_type = #tpu.core_type<tc>, window_params = [{transform_indices = @transform_0, window_bounds = array<i64: 1, 17, 32>}, {pipeline_mode = #tpu.pipeline_mode<synchronous>, transform_indices = @transform_1, window_bounds = array<i64: 24, 32>}, {transform_indices = @transform_2, window_bounds = array<i64: 1, 24, 16>}, {transform_indices = @transform_3, window_bounds = array<i64: 1, 24, 16>}, {transform_indices = @transform_4, window_bounds = array<i64: 1, 24, 1>}, {transform_indices = @transform_5, window_bounds = array<i64: 1, 24, 1>}]} {
    %c0 = arith.constant 0 : index
    %c0_0 = arith.constant 0 : index
    %0 = vector.load %arg2[%c0, %c0_0] : memref<24x32xf32, #tpu.memory_space<vmem>>, vector<24x32xf32>
    %cst = arith.constant 1.000000e+00 : f32
    %1 = vector.broadcast %cst : f32 to vector<1x32xf32>
    %c0_i32 = arith.constant 0 : i32
    %c1_i32 = arith.constant 1 : i32
    %2 = arith.muli %c0_i32, %c1_i32 : i32
    %c0_i32_1 = arith.constant 0 : i32
    %3 = arith.addi %c0_i32_1, %2 : i32
    %4 = arith.index_cast %3 : i32 to index
    %c1 = arith.constant 1 : index
    %c0_2 = arith.constant 0 : index
    %5 = vector.load %arg1[%4, %c1, %c0_2] : memref<1x17x32xf32, #tpu.memory_space<vmem>>, vector<1x16x32xf32>
    %6 = vector.shape_cast %5 : vector<1x16x32xf32> to vector<16x32xf32>
    %cst_3 = arith.constant dense<0.000000e+00> : vector<24x16xf32>
    %7 = tpu.matmul %0, %6, %cst_3 {dimension_numbers = #tpu.dot_dimension_numbers<[1], [1], [0], [0], [0, 0, 1, 0], [], []>, precision = #tpu.contract_precision<fp32>} : vector<24x32xf32>, vector<16x32xf32>, vector<24x16xf32> -> vector<24x16xf32>
    %8 = arith.mulf %6, %6 : vector<16x32xf32>
    %cst_4 = arith.constant dense<0.000000e+00> : vector<1x16xf32>
    %9 = tpu.matmul %1, %8, %cst_4 {dimension_numbers = #tpu.dot_dimension_numbers<[1], [1], [0], [0], [0, 0, 1, 0], [], []>, precision = #tpu.contract_precision<fp32>} : vector<1x32xf32>, vector<16x32xf32>, vector<1x16xf32> -> vector<1x16xf32>
    %cst_5 = arith.constant 1.000000e-24 : f32
    %10 = vector.broadcast %cst_5 : f32 to vector<1x16xf32>
    %11 = arith.maximumf %9, %10 : vector<1x16xf32>
    %12 = math.rsqrt %11 : vector<1x16xf32>
    %13 = vector.broadcast %12 : vector<1x16xf32> to vector<24x16xf32>
    %14 = arith.mulf %7, %13 : vector<24x16xf32>
    %15 = arith.index_cast %3 : i32 to index
    %c0_6 = arith.constant 0 : index
    %c0_7 = arith.constant 0 : index
    %16 = vector.load %arg3[%15, %c0_6, %c0_7] : memref<1x24x16xf32, #tpu.memory_space<vmem>>, vector<1x24x16xf32>
    %17 = vector.shape_cast %16 : vector<1x24x16xf32> to vector<24x16xf32>
    %18 = vector.shape_cast %14 : vector<24x16xf32> to vector<1x24x16xf32>
    tpu.vector_store %arg3[%15, %c0_6, %c0_7], %18 {strides = array<i32>} : memref<1x24x16xf32, #tpu.memory_space<vmem>>, vector<1x24x16xf32>,
    %19 = arith.index_cast %3 : i32 to index
    %c0_8 = arith.constant 0 : index
    %c0_9 = arith.constant 0 : index
    %20 = vector.load %arg4[%19, %c0_8, %c0_9] : memref<1x24x16xf32, #tpu.memory_space<vmem>>, vector<1x24x16xf32>
    %21 = vector.shape_cast %20 : vector<1x24x16xf32> to vector<24x16xf32>
    %22 = vector.shape_cast %7 : vector<24x16xf32> to vector<1x24x16xf32>
    tpu.vector_store %arg4[%19, %c0_8, %c0_9], %22 {strides = array<i32>} : memref<1x24x16xf32, #tpu.memory_space<vmem>>, vector<1x24x16xf32>,
    %cst_10 = arith.constant dense<0xFF800000> : vector<24xf32>
    %23 = vector.multi_reduction <maximumf>, %14, %cst_10 [1] : vector<24x16xf32> to vector<24xf32>
    %24 = vector.shape_cast %23 : vector<24xf32> to vector<24x1xf32>
    %25 = arith.index_cast %3 : i32 to index
    %c0_11 = arith.constant 0 : index
    %c0_12 = arith.constant 0 : index
    %26 = vector.load %arg5[%25, %c0_11, %c0_12] : memref<1x24x1xf32, #tpu.memory_space<vmem>>, vector<1x24x1xf32>
    %27 = vector.shape_cast %26 : vector<1x24x1xf32> to vector<24x1xf32>
    %28 = vector.shape_cast %24 : vector<24x1xf32> to vector<1x24x1xf32>
    tpu.vector_store %arg5[%25, %c0_11, %c0_12], %28 {strides = array<i32>} : memref<1x24x1xf32, #tpu.memory_space<vmem>>, vector<1x24x1xf32>,
    %cst_13 = arith.constant dense<0xFF800000> : vector<24xf32>
    %29 = vector.multi_reduction <maximumf>, %7, %cst_13 [1] : vector<24x16xf32> to vector<24xf32>
    %30 = vector.shape_cast %29 : vector<24xf32> to vector<24x1xf32>
    %31 = arith.index_cast %3 : i32 to index
    %c0_14 = arith.constant 0 : index
    %c0_15 = arith.constant 0 : index
    %32 = vector.load %arg6[%31, %c0_14, %c0_15] : memref<1x24x1xf32, #tpu.memory_space<vmem>>, vector<1x24x1xf32>
    %33 = vector.shape_cast %32 : vector<1x24x1xf32> to vector<24x1xf32>
    %34 = vector.shape_cast %30 : vector<24x1xf32> to vector<1x24x1xf32>
    tpu.vector_store %arg6[%31, %c0_14, %c0_15], %34 {strides = array<i32>} : memref<1x24x1xf32, #tpu.memory_space<vmem>>, vector<1x24x1xf32>,
    %c1_i32_16 = arith.constant 1 : i32
    return
  }
  func.func @transform_0(%arg0: i32) -> (i32, i32, i32) {
    %c0_i32 = arith.constant 0 : i32
    %c0_i32_0 = arith.constant 0 : i32
    %c0_i32_1 = arith.constant 0 : i32
    return %arg0, %c0_i32, %c0_i32_0 : i32, i32, i32
  }
  func.func @transform_1(%arg0: i32) -> (i32, i32) {
    %c0_i32 = arith.constant 0 : i32
    %c0_i32_0 = arith.constant 0 : i32
    %c0_i32_1 = arith.constant 0 : i32
    return %c0_i32, %c0_i32_0 : i32, i32
  }
  func.func @transform_2(%arg0: i32) -> (i32, i32, i32) {
    %c0_i32 = arith.constant 0 : i32
    %c0_i32_0 = arith.constant 0 : i32
    %c0_i32_1 = arith.constant 0 : i32
    return %arg0, %c0_i32, %c0_i32_0 : i32, i32, i32
  }
  func.func @transform_3(%arg0: i32) -> (i32, i32, i32) {
    %c0_i32 = arith.constant 0 : i32
    %c0_i32_0 = arith.constant 0 : i32
    %c0_i32_1 = arith.constant 0 : i32
    return %arg0, %c0_i32, %c0_i32_0 : i32, i32, i32
  }
  func.func @transform_4(%arg0: i32) -> (i32, i32, i32) {
    %c0_i32 = arith.constant 0 : i32
    %c0_i32_0 = arith.constant 0 : i32
    %c0_i32_1 = arith.constant 0 : i32
    return %arg0, %c0_i32, %c0_i32_0 : i32, i32, i32
  }
  func.func @transform_5(%arg0: i32) -> (i32, i32, i32) {
    %c0_i32 = arith.constant 0 : i32
    %c0_i32_0 = arith.constant 0 : i32
    %c0_i32_1 = arith.constant 0 : i32
    return %arg0, %c0_i32, %c0_i32_0 : i32, i32, i32
  }
}

</mosaic_0001>

<llo_original>
// kernel: tpu_custom_call.1
$region0: #{tpu_custom_call.1}
  #allocation0 [shape = 'u32[]', space=smem, size = 0x4, offset = 0x4, fixed_abs, tag = 'smem constant byte address 0x4 - core index']
  #allocation1 [shape = 'u32[144,128]{1,0:T(1,128)}', space=vmem, size = 0x12000, scoped, tag = 'internal scratch']
  %s0 = inlined_call_operand.vmem [shape: f32[2,17,32], index: 0, kind: input, shape index: {}]
  %s1 = inlined_call_operand.vmem [shape: f32[24,32], index: 1, kind: input, shape index: {}]
  %s2 = inlined_call_operand.vmem [shape: f32[2,24,16], index: 2, kind: output, shape index: {0}]
  %s3 = inlined_call_operand.vmem [shape: f32[2,24,16], index: 3, kind: output, shape index: {1}]
  %s4 = inlined_call_operand.vmem [shape: f32[2,24,1], index: 4, kind: output, shape index: {2}]
  %s5 = inlined_call_operand.vmem [shape: f32[2,24,1], index: 5, kind: output, shape index: {3}]
  %6 = xla_tuple %s2, %s3, %s4, %s5
  %s7 = sld [smem:[#allocation0]]
  $region65: #{tpu_custom_call.1} parent=0
    _
  %s9 = ssub.s32 1, %s7
  %s10 = scalar_select 0, %s9, %s7
  loop: start=0, step=1, limit=4
  $region2: #{tpu_custom_call.1} parent=0 // loop_pre_header
    _
  $region3: #{tpu_custom_call.1} parent=0 // loop_header
    %s12 = sphi 0, %s16
    %p13 = scmp.ge.s32.totalorder %s12, 4
    %s22 = sphi 0, %s24
    %s25 = sphi 0, %s22
    %s26 = sphi 0, %s25
    %s42 = sphi 0, %s26
    %s46 = sphi 0, %s46
    %s48 = sphi 0, %s46
    %s49 = sphi 0, %s48
    %s63 = sphi 0, %s49
    %s69 = sphi 0, %s71
    %s72 = sphi 0, %s69
    %s73 = sphi 0, %s72
    %s89 = sphi 0, %s73
    %s95 = sphi 0, %s97
    %s98 = sphi 0, %s95
    %s99 = sphi 0, %s98
    %s115 = sphi 0, %s99
    %s121 = sphi 0, %s123
    %s124 = sphi 0, %s121
    %s125 = sphi 0, %s124
    %s141 = sphi 0, %s125
    %s147 = sphi 0, %s149
    %s150 = sphi 0, %s147
    %s151 = sphi 0, %s150
    %s167 = sphi 0, %s151
  $region4: #{tpu_custom_call.1} parent=0 // loop_header_branch
    %15 = sbr.rel (%p13) target = $region8
  $region5: #{tpu_custom_call.1} parent=0 // loop_body
    %s17 = ssub.s32 %s12, 1
    %s18 = ssub.s32 %s12, 2
    %s19 = sadd.s32 %s12, 1
    %s20 = ssub.s32 %s12, %s19
    %p21 = scmp.eq.s32.totalorder %s20, 0
    %s23 = sadd.s32 %s22, 1
    %s24 = scalar_select %p21, %s22, %s23
    %p27 = pneg %p21
    %p28 = scmp.eq.s32.totalorder %s12, 1
    %p29 = por %p27, %p28
    %p30 = scmp.ne.s32.totalorder %s22, %s25
    %p31 = scmp.eq.s32.totalorder %s12, 0
    %p32 = por %p30, %p31
    %p33 = scmp.ne.s32.totalorder %s22, %s25
    %p34 = scmp.eq.s32.totalorder %s17, 1
    %p35 = por %p33, %p34
    %p36 = scmp.ne.s32.totalorder %s25, %s26
    %p37 = scmp.eq.s32.totalorder %s17, 0
    %p38 = por %p36, %p37
    %p39 = scmp.ne.s32.totalorder %s25, %s26
    %p40 = scmp.eq.s32.totalorder %s18, 1
    %p41 = por %p39, %p40
    %p43 = scmp.ne.s32.totalorder %s26, %s42
    %p44 = scmp.eq.s32.totalorder %s18, 0
    %p45 = por %p43, %p44
    %s47 = sadd.s32 %s46, 1
    %p50 = scmp.eq.s32.totalorder %s12, 1
    %p51 = scmp.ne.s32.totalorder %s46, %s48
    %p52 = scmp.eq.s32.totalorder %s12, 0
    %p53 = por %p51, %p52
    %p54 = scmp.ne.s32.totalorder %s46, %s48
    %p55 = scmp.eq.s32.totalorder %s17, 1
    %p56 = por %p54, %p55
    %p57 = scmp.ne.s32.totalorder %s48, %s49
    %p58 = scmp.eq.s32.totalorder %s17, 0
    %p59 = por %p57, %p58
    %p60 = scmp.ne.s32.totalorder %s48, %s49
    %p61 = scmp.eq.s32.totalorder %s18, 1
    %p62 = por %p60, %p61
    %p64 = scmp.ne.s32.totalorder %s49, %s63
    %p65 = scmp.eq.s32.totalorder %s18, 0
    %p66 = por %p64, %p65
    %s67 = ssub.s32 %s12, %s19
    %p68 = scmp.eq.s32.totalorder %s67, 0
    %s70 = sadd.s32 %s69, 1
    %s71 = scalar_select %p68, %s69, %s70
    %p74 = pneg %p68
    %p75 = scmp.eq.s32.totalorder %s12, 1
    %p76 = por %p74, %p75
    %p77 = scmp.ne.s32.totalorder %s69, %s72
    %p78 = scmp.eq.s32.totalorder %s12, 0
    %p79 = por %p77, %p78
    %p80 = scmp.ne.s32.totalorder %s69, %s72
    %p81 = scmp.eq.s32.totalorder %s17, 1
    %p82 = por %p80, %p81
    %p83 = scmp.ne.s32.totalorder %s72, %s73
    %p84 = scmp.eq.s32.totalorder %s17, 0
    %p85 = por %p83, %p84
    %p86 = scmp.ne.s32.totalorder %s72, %s73
    %p87 = scmp.eq.s32.totalorder %s18, 1
    %p88 = por %p86, %p87
    %p90 = scmp.ne.s32.totalorder %s73, %s89
    %p91 = scmp.eq.s32.totalorder %s18, 0
    %p92 = por %p90, %p91
    %s93 = ssub.s32 %s12, %s19
    %p94 = scmp.eq.s32.totalorder %s93, 0
    %s96 = sadd.s32 %s95, 1
    %s97 = scalar_select %p94, %s95, %s96
    %p100 = pneg %p94
    %p101 = scmp.eq.s32.totalorder %s12, 1
    %p102 = por %p100, %p101
    %p103 = scmp.ne.s32.totalorder %s95, %s98
    %p104 = scmp.eq.s32.totalorder %s12, 0
    %p105 = por %p103, %p104
    %p106 = scmp.ne.s32.totalorder %s95, %s98
    %p107 = scmp.eq.s32.totalorder %s17, 1
    %p108 = por %p106, %p107
    %p109 = scmp.ne.s32.totalorder %s98, %s99
    %p110 = scmp.eq.s32.totalorder %s17, 0
    %p111 = por %p109, %p110
    %p112 = scmp.ne.s32.totalorder %s98, %s99
    %p113 = scmp.eq.s32.totalorder %s18, 1
    %p114 = por %p112, %p113
    %p116 = scmp.ne.s32.totalorder %s99, %s115
    %p117 = scmp.eq.s32.totalorder %s18, 0
    %p118 = por %p116, %p117
    %s119 = ssub.s32 %s12, %s19
    %p120 = scmp.eq.s32.totalorder %s119, 0
    %s122 = sadd.s32 %s121, 1
    %s123 = scalar_select %p120, %s121, %s122
    %p126 = pneg %p120
    %p127 = scmp.eq.s32.totalorder %s12, 1
    %p128 = por %p126, %p127
    %p129 = scmp.ne.s32.totalorder %s121, %s124
    %p130 = scmp.eq.s32.totalorder %s12, 0
    %p131 = por %p129, %p130
    %p132 = scmp.ne.s32.totalorder %s121, %s124
    %p133 = scmp.eq.s32.totalorder %s17, 1
    %p134 = por %p132, %p133
    %p135 = scmp.ne.s32.totalorder %s124, %s125
    %p136 = scmp.eq.s32.totalorder %s17, 0
    %p137 = por %p135, %p136
    %p138 = scmp.ne.s32.totalorder %s124, %s125
    %p139 = scmp.eq.s32.totalorder %s18, 1
    %p140 = por %p138, %p139
    %p142 = scmp.ne.s32.totalorder %s125, %s141
    %p143 = scmp.eq.s32.totalorder %s18, 0
    %p144 = por %p142, %p143
    %s145 = ssub.s32 %s12, %s19
    %p146 = scmp.eq.s32.totalorder %s145, 0
    %s148 = sadd.s32 %s147, 1
    %s149 = scalar_select %p146, %s147, %s148
    %p152 = pneg %p146
    %p153 = scmp.eq.s32.totalorder %s12, 1
    %p154 = por %p152, %p153
    %p155 = scmp.ne.s32.totalorder %s147, %s150
    %p156 = scmp.eq.s32.totalorder %s12, 0
    %p157 = por %p155, %p156
    %p158 = scmp.ne.s32.totalorder %s147, %s150
    %p159 = scmp.eq.s32.totalorder %s17, 1
    %p160 = por %p158, %p159
    %p161 = scmp.ne.s32.totalorder %s150, %s151
    %p162 = scmp.eq.s32.totalorder %s17, 0
    %p163 = por %p161, %p162
    %p164 = scmp.ne.s32.totalorder %s150, %s151
    %p165 = scmp.eq.s32.totalorder %s18, 1
    %p166 = por %p164, %p165
    %p168 = scmp.ne.s32.totalorder %s151, %s167
    %p169 = scmp.eq.s32.totalorder %s18, 0
    %p170 = por %p168, %p169
    %p171 = scmp.le.s32.totalorder 1, %s12
    %p172 = scmp.lt.s32.totalorder %s12, 3
    %p173 = pnand %p171, %p172
    %p174 = pneg %p173
    // Predicated region
    $region9: #{tpu_custom_call.1} parent=5 // pred_check
      _
    $region10: #{tpu_custom_call.1} parent=5 // pred_check_branch
      %176 = sbr.rel (%p173) target = $region12
    $region11: #{tpu_custom_call.1} parent=5 // pred_region
      %s177 = ssub.s32 %s12, 1
      // Predicated region
      $region13: #{tpu_custom_call.1} parent=11 // pred_check
        %p178 = pneg %p59
      $region14: #{tpu_custom_call.1} parent=11 // pred_check_branch
        %180 = sbr.rel (%p178) target = $region16
      $region15: #{tpu_custom_call.1} parent=11 // pred_region
        _
      $region16: #{tpu_custom_call.1} parent=11 // pred_fallthru
        _
    $region12: #{tpu_custom_call.1} parent=5 // pred_fallthru
      _
    %p181 = scmp.lt.s32.totalorder %s12, 2
    // Predicated region
    $region17: #{tpu_custom_call.1} parent=5 // pred_check
      %p182 = pneg %p181
    $region18: #{tpu_custom_call.1} parent=5 // pred_check_branch
      %184 = sbr.rel (%p182) target = $region20
    $region19: #{tpu_custom_call.1} parent=5 // pred_region
      // Predicated region
      $region21: #{tpu_custom_call.1} parent=19 // pred_check
        %p185 = pneg %p32
      $region22: #{tpu_custom_call.1} parent=19 // pred_check_branch
        %187 = sbr.rel (%p185) target = $region24
      $region23: #{tpu_custom_call.1} parent=19 // pred_region
        %p188 = scmp.lt.s32.totalorder %s12, 1
        %s189 = scalar_select %p188, %s12, 1
        %s190 = smul.addr %s189, 3
        %s191 = smul.addr %s190, 8
        %s192 = scalar_lea.vmem %s0, %s191
      $region24: #{tpu_custom_call.1} parent=19 // pred_fallthru
        _
    $region20: #{tpu_custom_call.1} parent=5 // pred_fallthru
      _
    %p193 = scmp.le.s32.totalorder 1, %s12
    %p194 = scmp.lt.s32.totalorder %s12, 3
    %p195 = pnand %p193, %p194
    %p196 = pneg %p195
    // Predicated region
    $region25: #{tpu_custom_call.1} parent=5 // pred_check
      _
    $region26: #{tpu_custom_call.1} parent=5 // pred_check_branch
      %198 = sbr.rel (%p195) target = $region28
    $region27: #{tpu_custom_call.1} parent=5 // pred_region
      %s199 = ssub.s32 %s12, 1
      %p200 = scmp.lt.s32.totalorder %s17, 1
      %s201 = scalar_select %p200, %s17, 1
      %s202 = smul.addr %s201, 3
      %s203 = smul.addr %s202, 8
      %s204 = scalar_lea.vmem %s0, %s203
      %p205 = pneg %p38
      %p206 = pneg %p35
      %p207 = pneg %p59
      %p208 = pneg %p56
      %p209 = pneg %p85
      %p210 = pneg %p82
      %p211 = scmp.lt.s32.totalorder %s17, 1
      %s212 = scalar_select %p211, %s17, 1
      %s213 = smul.addr %s212, 3
      %s214 = smul.addr %s213, 8
      %s215 = scalar_lea.vmem %s2, %s214
      %p216 = pneg %p111
      %p217 = pneg %p108
      %p218 = scmp.lt.s32.totalorder %s17, 1
      %s219 = scalar_select %p218, %s17, 1
      %s220 = smul.addr %s219, 3
      %s221 = smul.addr %s220, 8
      %s222 = scalar_lea.vmem %s3, %s221
      %p223 = pneg %p137
      %p224 = pneg %p134
      %p225 = scmp.lt.s32.totalorder %s17, 1
      %s226 = scalar_select %p225, %s17, 1
      %s227 = smul.addr %s226, 3
      %s228 = smul.addr %s227, 8
      %s229 = scalar_lea.vmem %s4, %s228
      %p230 = pneg %p163
      %p231 = pneg %p160
      %p232 = scmp.lt.s32.totalorder %s17, 1
      %s233 = scalar_select %p232, %s17, 1
      %s234 = smul.addr %s233, 3
      %s235 = smul.addr %s234, 8
      %s236 = scalar_lea.vmem %s5, %s235
      %p237 = scmp.lt.s32.totalorder %s17, 1
      %s238 = scalar_select %p237, %s17, 1
      %s239 = smul.addr %s238, 3
      %s240 = smul.addr %s239, 8
      %s241 = scalar_lea.vmem %s0, %s240
      %p242 = scmp.lt.s32.totalorder %s17, 1
      %s243 = scalar_select %p242, %s17, 1
      %s244 = smul.addr %s243, 3
      %s245 = smul.addr %s244, 8
      %s246 = scalar_lea.vmem %s2, %s245
      %p247 = scmp.lt.s32.totalorder %s17, 1
      %s248 = scalar_select %p247, %s17, 1
      %s249 = smul.addr %s248, 3
      %s250 = smul.addr %s249, 8
      %s251 = scalar_lea.vmem %s3, %s250
      %p252 = scmp.lt.s32.totalorder %s17, 1
      %s253 = scalar_select %p252, %s17, 1
      %s254 = smul.addr %s253, 3
      %s255 = smul.addr %s254, 8
      %s256 = scalar_lea.vmem %s4, %s255
      %p257 = scmp.lt.s32.totalorder %s17, 1
      %s258 = scalar_select %p257, %s17, 1
      %s259 = smul.addr %s258, 3
      %s260 = smul.addr %s259, 8
      %s261 = scalar_lea.vmem %s5, %s260
      %v262 = vld [vmem:[%s1] sm:$0xff]
      %v263 = vld [vmem:[%s1 + $0x8] sm:$0xff]
      %v264 = vld [vmem:[%s1 + $0x10] sm:$0xff]
      %v265 = vld [vmem:[%s241 + $0x1] sm:$0xff]
      %v266 = vld [vmem:[%s241 + $0x9] sm:$0xff]
      %vm267 = vcmask 261120
      %v269 = vsel %vm267, %v262, 0
      %v272 = vsel %vm267, %v263, 0
      %v275 = vsel %vm267, %v264, 0
      %v278 = vsel %vm267, %v265, 0
      %v281 = vsel %vm267, %v266, 0
      %283 = vmatprep.subr.mxu0 0.0
      %v284 = vand.u32 %v278, 4294901760
      %285 = vmatpush1.xpose.msra.mxu0 %v284
      %286 = vmatprep.subr.mxu0 0.0
      %v287 = vand.u32 %v281, 4294901760
      %288 = vmatpush1.xpose.msra.mxu0 %v287
      %289 = vmatprep.subr.mxu0 0.0
      %290 = vmatpush1.xpose.msra.mxu0 0.0
      %291 = vmatprep.subr.mxu0 0.0
      %292 = vmatpush1.xpose.msra.mxu0 0.0
      %293 = vmatprep.subr.mxu0 0.0
      %294 = vmatpush1.xpose.msra.mxu0 0.0
      %295 = vmatprep.subr.mxu0 0.0
      %296 = vmatpush1.xpose.msra.mxu0 0.0
      %297 = vmatprep.subr.mxu0 0.0
      %298 = vmatpush1.xpose.msra.mxu0 0.0
      %299 = vmatprep.subr.mxu0 0.0
      %300 = vmatpush1.xpose.msra.mxu0 0.0
      %301 = vmatprep.subr.mxu0 0.0
      %302 = vmatpush1.xpose.msra.mxu0 0.0
      %303 = vmatprep.subr.mxu0 0.0
      %304 = vmatpush1.xpose.msra.mxu0 0.0
      %305 = vmatprep.subr.mxu0 0.0
      %306 = vmatpush1.xpose.msra.mxu0 0.0
      %307 = vmatprep.subr.mxu0 0.0
      %308 = vmatpush1.xpose.msra.mxu0 0.0
      %309 = vmatprep.subr.mxu0 0.0
      %310 = vmatpush1.xpose.msra.mxu0 0.0
      %311 = vmatprep.subr.mxu0 0.0
      %312 = vmatpush1.xpose.msra.mxu0 0.0
      %313 = vmatprep.subr.mxu0 0.0
      %314 = vmatpush1.xpose.msra.mxu0 0.0
      %315 = vmatprep.subr.mxu0 0.0
      %316 = vmatpush1.xpose.msra.mxu0 0.0
      %317 = vmatprep.subr.mxu0 0.0
      %318 = vmatpush1.xpose.msra.mxu0 0.0
      %319 = vmatprep.subr.mxu0 0.0
      %320 = vmatpush1.xpose.msra.mxu0 0.0
      %321 = vmatprep.subr.mxu0 0.0
      %322 = vmatpush1.xpose.msra.mxu0 0.0
      %323 = vmatprep.subr.mxu0 0.0
      %324 = vmatpush1.xpose.msra.mxu0 0.0
      %325 = vmatprep.subr.mxu0 0.0
      %326 = vmatpush1.xpose.msra.mxu0 0.0
      %327 = vmatprep.subr.mxu0 0.0
      %328 = vmatpush1.xpose.msra.mxu0 0.0
      %329 = vmatprep.subr.mxu0 0.0
      %330 = vmatpush1.xpose.msra.mxu0 0.0
      %331 = vmatprep.subr.mxu0 0.0
      %332 = vmatpush1.xpose.msra.mxu0 0.0
      %333 = vmatprep.subr.mxu0 0.0
      %334 = vmatpush1.xpose.msra.mxu0 0.0
      %335 = vmatprep.subr.mxu0 0.0
      %336 = vmatpush1.xpose.msra.mxu0 0.0
      %337 = vmatprep.subr.mxu0 0.0
      %338 = vmatpush1.xpose.msra.mxu0 0.0
      %339 = vmatprep.subr.mxu0 0.0
      %340 = vmatpush1.xpose.msra.mxu0 0.0
      %341 = vmatprep.subr.mxu0 0.0
      %342 = vmatpush1.xpose.msra.mxu0 0.0
      %343 = vmatprep.subr.mxu0 0.0
      %344 = vmatpush1.xpose.msra.mxu0 0.0
      %345 = vmatprep.subr.mxu0 0.0
      %346 = vmatpush1.xpose.msra.mxu0 0.0
      %347 = vmatprep.subr.mxu0 0.0
      %348 = vmatpush1.xpose.msra.mxu0 0.0
      %349 = vmatprep.mubr.f32.mxu0 0.0
      %v350 = vand.u32 %v269, 4294901760
      %v351 = vsub.f32 %v269, %v350
      %v352 = vand.u32 %v351, 4294901760
      %v353 = vsub.f32 %v351, %v352
      %v354 = vand.u32 %v353, 4294901760
      %355 = vmatmul.mubr.f32.gmra.mrb[0].mxu0 %v354
      %v356 = vpop.f32.mrb[0].mxu0
      %v357 = vadd.f32 0.0, %v356
      %v358 = vpop.f32.mrb[0].mxu0
      %359 = vmatprep.mubr.f32.mxu0 0.0
      %v360 = vand.u32 %v272, 4294901760
      %v361 = vsub.f32 %v272, %v360
      %v362 = vand.u32 %v361, 4294901760
      %v363 = vsub.f32 %v361, %v362
      %v364 = vand.u32 %v363, 4294901760
      %365 = vmatmul.mubr.f32.gmra.mrb[0].mxu0 %v364
      %v366 = vpop.f32.mrb[0].mxu0
      %v367 = vadd.f32 0.0, %v366
      %v368 = vpop.f32.mrb[0].mxu0
      %369 = vmatprep.mubr.f32.mxu0 0.0
      %v370 = vand.u32 %v275, 4294901760
      %v371 = vsub.f32 %v275, %v370
      %v372 = vand.u32 %v371, 4294901760
      %v373 = vsub.f32 %v371, %v372
      %v374 = vand.u32 %v373, 4294901760
      %375 = vmatmul.mubr.f32.gmra.mrb[0].mxu0 %v374
      %v376 = vpop.f32.mrb[0].mxu0
      %v377 = vadd.f32 0.0, %v376
      %v378 = vpop.f32.mrb[0].mxu0
      %379 = vdwg.mxu0
      %380 = vmatprep.subr.mxu0 0.0
      %v381 = vand.u32 %v278, 4294901760
      %v382 = vsub.f32 %v278, %v381
      %v383 = vand.u32 %v382, 4294901760
      %v384 = vsub.f32 %v382, %v383
      %v385 = vand.u32 %v384, 4294901760
      %386 = vmatpush1.xpose.msra.mxu0 %v385
      %387 = vmatprep.subr.mxu0 0.0
      %v388 = vand.u32 %v281, 4294901760
      %v389 = vsub.f32 %v281, %v388
      %v390 = vand.u32 %v389, 4294901760
      %v391 = vsub.f32 %v389, %v390
      %v392 = vand.u32 %v391, 4294901760
      %393 = vmatpush1.xpose.msra.mxu0 %v392
      %394 = vmatprep.subr.mxu0 0.0
      %395 = vmatpush1.xpose.msra.mxu0 0.0
      %396 = vmatprep.subr.mxu0 0.0
      %397 = vmatpush1.xpose.msra.mxu0 0.0
      %398 = vmatprep.subr.mxu0 0.0
      %399 = vmatpush1.xpose.msra.mxu0 0.0
      %400 = vmatprep.subr.mxu0 0.0
      %401 = vmatpush1.xpose.msra.mxu0 0.0
      %402 = vmatprep.subr.mxu0 0.0
      %403 = vmatpush1.xpose.msra.mxu0 0.0
      %404 = vmatprep.subr.mxu0 0.0
      %405 = vmatpush1.xpose.msra.mxu0 0.0
      %406 = vmatprep.subr.mxu0 0.0
      %407 = vmatpush1.xpose.msra.mxu0 0.0
      %408 = vmatprep.subr.mxu0 0.0
      %409 = vmatpush1.xpose.msra.mxu0 0.0
      %410 = vmatprep.subr.mxu0 0.0
      %411 = vmatpush1.xpose.msra.mxu0 0.0
      %412 = vmatprep.subr.mxu0 0.0
      %413 = vmatpush1.xpose.msra.mxu0 0.0
      %414 = vmatprep.subr.mxu0 0.0
      %415 = vmatpush1.xpose.msra.mxu0 0.0
      %416 = vmatprep.subr.mxu0 0.0
      %417 = vmatpush1.xpose.msra.mxu0 0.0
      %418 = vmatprep.subr.mxu0 0.0
      %419 = vmatpush1.xpose.msra.mxu0 0.0
      %420 = vmatprep.subr.mxu0 0.0
      %421 = vmatpush1.xpose.msra.mxu0 0.0
      %422 = vmatprep.subr.mxu0 0.0
      %423 = vmatpush1.xpose.msra.mxu0 0.0
      %424 = vmatprep.subr.mxu0 0.0
      %425 = vmatpush1.xpose.msra.mxu0 0.0
      %426 = vmatprep.subr.mxu0 0.0
      %427 = vmatpush1.xpose.msra.mxu0 0.0
      %428 = vmatprep.subr.mxu0 0.0
      %429 = vmatpush1.xpose.msra.mxu0 0.0
      %430 = vmatprep.subr.mxu0 0.0
      %431 = vmatpush1.xpose.msra.mxu0 0.0
      %432 = vmatprep.subr.mxu0 0.0
      %433 = vmatpush1.xpose.msra.mxu0 0.0
      %434 = vmatprep.subr.mxu0 0.0
      %435 = vmatpush1.xpose.msra.mxu0 0.0
      %436 = vmatprep.subr.mxu0 0.0
      %437 = vmatpush1.xpose.msra.mxu0 0.0
      %438 = vmatprep.subr.mxu0 0.0
      %439 = vmatpush1.xpose.msra.mxu0 0.0
      %440 = vmatprep.subr.mxu0 0.0
      %441 = vmatpush1.xpose.msra.mxu0 0.0
      %442 = vmatprep.subr.mxu0 0.0
      %443 = vmatpush1.xpose.msra.mxu0 0.0
      %444 = vmatprep.subr.mxu0 0.0
      %445 = vmatpush1.xpose.msra.mxu0 0.0
      %446 = vmatprep.subr.mxu0 0.0
      %447 = vmatpush1.xpose.msra.mxu0 0.0
      %448 = vmatprep.subr.mxu0 0.0
      %449 = vmatpush1.xpose.msra.mxu0 0.0
      %450 = vmatprep.subr.mxu0 0.0
      %451 = vmatpush1.xpose.msra.mxu0 0.0
      %452 = vmatprep.subr.mxu0 0.0
      %453 = vmatpush1.xpose.msra.mxu0 0.0
      %454 = vmatprep.mubr.f32.mxu0 0.0
      %v455 = vand.u32 %v269, 4294901760
      %456 = vmatmul.mubr.f32.gmra.mrb[0].mxu0 %v455
      %v457 = vpop.f32.mrb[0].mxu0
      %v458 = vadd.f32 %v357, %v457
      %v459 = vpop.f32.mrb[0].mxu0
      %460 = vmatprep.mubr.f32.mxu0 0.0
      %v461 = vand.u32 %v272, 4294901760
      %462 = vmatmul.mubr.f32.gmra.mrb[0].mxu0 %v461
      %v463 = vpop.f32.mrb[0].mxu0
      %v464 = vadd.f32 %v367, %v463
      %v465 = vpop.f32.mrb[0].mxu0
      %466 = vmatprep.mubr.f32.mxu0 0.0
      %v467 = vand.u32 %v275, 4294901760
      %468 = vmatmul.mubr.f32.gmra.mrb[0].mxu0 %v467
      %v469 = vpop.f32.mrb[0].mxu0
      %v470 = vadd.f32 %v377, %v469
      %v471 = vpop.f32.mrb[0].mxu0
      %472 = vdwg.mxu0
      %473 = vmatprep.subr.mxu0 0.0
      %v474 = vand.u32 %v278, 4294901760
      %v475 = vsub.f32 %v278, %v474
      %476 = vmatpush1.xpose.msra.mxu0 %v475
      %477 = vmatprep.subr.mxu0 0.0
      %v478 = vand.u32 %v281, 4294901760
      %v479 = vsub.f32 %v281, %v478
      %480 = vmatpush1.xpose.msra.mxu0 %v479
      %481 = vmatprep.subr.mxu0 0.0
      %482 = vmatpush1.xpose.msra.mxu0 0.0
      %483 = vmatprep.subr.mxu0 0.0
      %484 = vmatpush1.xpose.msra.mxu0 0.0
      %485 = vmatprep.subr.mxu0 0.0
      %486 = vmatpush1.xpose.msra.mxu0 0.0
      %487 = vmatprep.subr.mxu0 0.0
      %488 = vmatpush1.xpose.msra.mxu0 0.0
      %489 = vmatprep.subr.mxu0 0.0
      %490 = vmatpush1.xpose.msra.mxu0 0.0
      %491 = vmatprep.subr.mxu0 0.0
      %492 = vmatpush1.xpose.msra.mxu0 0.0
      %493 = vmatprep.subr.mxu0 0.0
      %494 = vmatpush1.xpose.msra.mxu0 0.0
      %495 = vmatprep.subr.mxu0 0.0
      %496 = vmatpush1.xpose.msra.mxu0 0.0
      %497 = vmatprep.subr.mxu0 0.0
      %498 = vmatpush1.xpose.msra.mxu0 0.0
      %499 = vmatprep.subr.mxu0 0.0
      %500 = vmatpush1.xpose.msra.mxu0 0.0
      %501 = vmatprep.subr.mxu0 0.0
      %502 = vmatpush1.xpose.msra.mxu0 0.0
      %503 = vmatprep.subr.mxu0 0.0
      %504 = vmatpush1.xpose.msra.mxu0 0.0
      %505 = vmatprep.subr.mxu0 0.0
      %506 = vmatpush1.xpose.msra.mxu0 0.0
      %507 = vmatprep.subr.mxu0 0.0
      %508 = vmatpush1.xpose.msra.mxu0 0.0
      %509 = vmatprep.subr.mxu0 0.0
      %510 = vmatpush1.xpose.msra.mxu0 0.0
      %511 = vmatprep.subr.mxu0 0.0
      %512 = vmatpush1.xpose.msra.mxu0 0.0
      %513 = vmatprep.subr.mxu0 0.0
      %514 = vmatpush1.xpose.msra.mxu0 0.0
      %515 = vmatprep.subr.mxu0 0.0
      %516 = vmatpush1.xpose.msra.mxu0 0.0
      %517 = vmatprep.subr.mxu0 0.0
      %518 = vmatpush1.xpose.msra.mxu0 0.0
      %519 = vmatprep.subr.mxu0 0.0
      %520 = vmatpush1.xpose.msra.mxu0 0.0
      %521 = vmatprep.subr.mxu0 0.0
      %522 = vmatpush1.xpose.msra.mxu0 0.0
      %523 = vmatprep.subr.mxu0 0.0
      %524 = vmatpush1.xpose.msra.mxu0 0.0
      %525 = vmatprep.subr.mxu0 0.0
      %526 = vmatpush1.xpose.msra.mxu0 0.0
      %527 = vmatprep.subr.mxu0 0.0
      %528 = vmatpush1.xpose.msra.mxu0 0.0
      %529 = vmatprep.subr.mxu0 0.0
      %530 = vmatpush1.xpose.msra.mxu0 0.0
      %531 = vmatprep.subr.mxu0 0.0
      %532 = vmatpush1.xpose.msra.mxu0 0.0
      %533 = vmatprep.subr.mxu0 0.0
      %534 = vmatpush1.xpose.msra.mxu0 0.0
      %535 = vmatprep.subr.mxu0 0.0
      %536 = vmatpush1.xpose.msra.mxu0 0.0
      %537 = vmatprep.subr.mxu0 0.0
      %538 = vmatpush1.xpose.msra.mxu0 0.0
      %539 = vmatprep.subr.mxu0 0.0
      %540 = vmatpush1.xpose.msra.mxu0 0.0
      %541 = vmatprep.mubr.f32.mxu0 0.0
      %v542 = vand.u32 %v269, 4294901760
      %v543 = vsub.f32 %v269, %v542
      %544 = vmatmul.mubr.f32.gmra.mrb[0].mxu0 %v543
      %v545 = vpop.f32.mrb[0].mxu0
      %v546 = vadd.f32 %v458, %v545
      %v547 = vpop.f32.mrb[0].mxu0
      %548 = vmatprep.mubr.f32.mxu0 0.0
      %v549 = vand.u32 %v272, 4294901760
      %v550 = vsub.f32 %v272, %v549
      %551 = vmatmul.mubr.f32.gmra.mrb[0].mxu0 %v550
      %v552 = vpop.f32.mrb[0].mxu0
      %v553 = vadd.f32 %v464, %v552
      %v554 = vpop.f32.mrb[0].mxu0
      %555 = vmatprep.mubr.f32.mxu0 0.0
      %v556 = vand.u32 %v275, 4294901760
      %v557 = vsub.f32 %v275, %v556
      %558 = vmatmul.mubr.f32.gmra.mrb[0].mxu0 %v557
      %v559 = vpop.f32.mrb[0].mxu0
      %v560 = vadd.f32 %v470, %v559
      %v561 = vpop.f32.mrb[0].mxu0
      %562 = vdwg.mxu0
      %563 = vmatprep.subr.mxu0 0.0
      %v564 = vand.u32 %v278, 4294901760
      %565 = vmatpush1.xpose.msra.mxu0 %v564
      %566 = vmatprep.subr.mxu0 0.0
      %v567 = vand.u32 %v281, 4294901760
      %568 = vmatpush1.xpose.msra.mxu0 %v567
      %569 = vmatprep.subr.mxu0 0.0
      %570 = vmatpush1.xpose.msra.mxu0 0.0
      %571 = vmatprep.subr.mxu0 0.0
      %572 = vmatpush1.xpose.msra.mxu0 0.0
      %573 = vmatprep.subr.mxu0 0.0
      %574 = vmatpush1.xpose.msra.mxu0 0.0
      %575 = vmatprep.subr.mxu0 0.0
      %576 = vmatpush1.xpose.msra.mxu0 0.0
      %577 = vmatprep.subr.mxu0 0.0
      %578 = vmatpush1.xpose.msra.mxu0 0.0
      %579 = vmatprep.subr.mxu0 0.0
      %580 = vmatpush1.xpose.msra.mxu0 0.0
      %581 = vmatprep.subr.mxu0 0.0
      %582 = vmatpush1.xpose.msra.mxu0 0.0
      %583 = vmatprep.subr.mxu0 0.0
      %584 = vmatpush1.xpose.msra.mxu0 0.0
      %585 = vmatprep.subr.mxu0 0.0
      %586 = vmatpush1.xpose.msra.mxu0 0.0
      %587 = vmatprep.subr.mxu0 0.0
      %588 = vmatpush1.xpose.msra.mxu0 0.0
      %589 = vmatprep.subr.mxu0 0.0
      %590 = vmatpush1.xpose.msra.mxu0 0.0
      %591 = vmatprep.subr.mxu0 0.0
      %592 = vmatpush1.xpose.msra.mxu0 0.0
      %593 = vmatprep.subr.mxu0 0.0
      %594 = vmatpush1.xpose.msra.mxu0 0.0
      %595 = vmatprep.subr.mxu0 0.0
      %596 = vmatpush1.xpose.msra.mxu0 0.0
      %597 = vmatprep.subr.mxu0 0.0
      %598 = vmatpush1.xpose.msra.mxu0 0.0
      %599 = vmatprep.subr.mxu0 0.0
      %600 = vmatpush1.xpose.msra.mxu0 0.0
      %601 = vmatprep.subr.mxu0 0.0
      %602 = vmatpush1.xpose.msra.mxu0 0.0
      %603 = vmatprep.subr.mxu0 0.0
      %604 = vmatpush1.xpose.msra.mxu0 0.0
      %605 = vmatprep.subr.mxu0 0.0
      %606 = vmatpush1.xpose.msra.mxu0 0.0
      %607 = vmatprep.subr.mxu0 0.0
      %608 = vmatpush1.xpose.msra.mxu0 0.0
      %609 = vmatprep.subr.mxu0 0.0
      %610 = vmatpush1.xpose.msra.mxu0 0.0
      %611 = vmatprep.subr.mxu0 0.0
      %612 = vmatpush1.xpose.msra.mxu0 0.0
      %613 = vmatprep.subr.mxu0 0.0
      %614 = vmatpush1.xpose.msra.mxu0 0.0
      %615 = vmatprep.subr.mxu0 0.0
      %616 = vmatpush1.xpose.msra.mxu0 0.0
      %617 = vmatprep.subr.mxu0 0.0
      %618 = vmatpush1.xpose.msra.mxu0 0.0
      %619 = vmatprep.subr.mxu0 0.0
      %620 = vmatpush1.xpose.msra.mxu0 0.0
      %621 = vmatprep.subr.mxu0 0.0
      %622 = vmatpush1.xpose.msra.mxu0 0.0
      %623 = vmatprep.subr.mxu0 0.0
      %624 = vmatpush1.xpose.msra.mxu0 0.0
      %625 = vmatprep.subr.mxu0 0.0
      %626 = vmatpush1.xpose.msra.mxu0 0.0
      %627 = vmatprep.subr.mxu0 0.0
      %628 = vmatpush1.xpose.msra.mxu0 0.0
      %629 = vmatprep.mubr.f32.mxu0 0.0
      %v630 = vand.u32 %v269, 4294901760
      %v631 = vsub.f32 %v269, %v630
      %v632 = vand.u32 %v631, 4294901760
      %633 = vmatmul.mubr.f32.gmra.mrb[0].mxu0 %v632
      %v634 = vpop.f32.mrb[0].mxu0
      %v635 = vadd.f32 %v546, %v634
      %v636 = vpop.f32.mrb[0].mxu0
      %637 = vmatprep.mubr.f32.mxu0 0.0
      %v638 = vand.u32 %v272, 4294901760
      %v639 = vsub.f32 %v272, %v638
      %v640 = vand.u32 %v639, 4294901760
      %641 = vmatmul.mubr.f32.gmra.mrb[0].mxu0 %v640
      %v642 = vpop.f32.mrb[0].mxu0
      %v643 = vadd.f32 %v553, %v642
      %v644 = vpop.f32.mrb[0].mxu0
      %645 = vmatprep.mubr.f32.mxu0 0.0
      %v646 = vand.u32 %v275, 4294901760
      %v647 = vsub.f32 %v275, %v646
      %v648 = vand.u32 %v647, 4294901760
      %649 = vmatmul.mubr.f32.gmra.mrb[0].mxu0 %v648
      %v650 = vpop.f32.mrb[0].mxu0
      %v651 = vadd.f32 %v560, %v650
      %v652 = vpop.f32.mrb[0].mxu0
      %653 = vdwg.mxu0
      %654 = vmatprep.subr.mxu0 0.0
      %v655 = vand.u32 %v278, 4294901760
      %v656 = vsub.f32 %v278, %v655
      %v657 = vand.u32 %v656, 4294901760
      %658 = vmatpush1.xpose.msra.mxu0 %v657
      %659 = vmatprep.subr.mxu0 0.0
      %v660 = vand.u32 %v281, 4294901760
      %v661 = vsub.f32 %v281, %v660
      %v662 = vand.u32 %v661, 4294901760
      %663 = vmatpush1.xpose.msra.mxu0 %v662
      %664 = vmatprep.subr.mxu0 0.0
      %665 = vmatpush1.xpose.msra.mxu0 0.0
      %666 = vmatprep.subr.mxu0 0.0
      %667 = vmatpush1.xpose.msra.mxu0 0.0
      %668 = vmatprep.subr.mxu0 0.0
      %669 = vmatpush1.xpose.msra.mxu0 0.0
      %670 = vmatprep.subr.mxu0 0.0
      %671 = vmatpush1.xpose.msra.mxu0 0.0
      %672 = vmatprep.subr.mxu0 0.0
      %673 = vmatpush1.xpose.msra.mxu0 0.0
      %674 = vmatprep.subr.mxu0 0.0
      %675 = vmatpush1.xpose.msra.mxu0 0.0
      %676 = vmatprep.subr.mxu0 0.0
      %677 = vmatpush1.xpose.msra.mxu0 0.0
      %678 = vmatprep.subr.mxu0 0.0
      %679 = vmatpush1.xpose.msra.mxu0 0.0
      %680 = vmatprep.subr.mxu0 0.0
      %681 = vmatpush1.xpose.msra.mxu0 0.0
      %682 = vmatprep.subr.mxu0 0.0
      %683 = vmatpush1.xpose.msra.mxu0 0.0
      %684 = vmatprep.subr.mxu0 0.0
      %685 = vmatpush1.xpose.msra.mxu0 0.0
      %686 = vmatprep.subr.mxu0 0.0
      %687 = vmatpush1.xpose.msra.mxu0 0.0
      %688 = vmatprep.subr.mxu0 0.0
      %689 = vmatpush1.xpose.msra.mxu0 0.0
      %690 = vmatprep.subr.mxu0 0.0
      %691 = vmatpush1.xpose.msra.mxu0 0.0
      %692 = vmatprep.subr.mxu0 0.0
      %693 = vmatpush1.xpose.msra.mxu0 0.0
      %694 = vmatprep.subr.mxu0 0.0
      %695 = vmatpush1.xpose.msra.mxu0 0.0
      %696 = vmatprep.subr.mxu0 0.0
      %697 = vmatpush1.xpose.msra.mxu0 0.0
      %698 = vmatprep.subr.mxu0 0.0
      %699 = vmatpush1.xpose.msra.mxu0 0.0
      %700 = vmatprep.subr.mxu0 0.0
      %701 = vmatpush1.xpose.msra.mxu0 0.0
      %702 = vmatprep.subr.mxu0 0.0
      %703 = vmatpush1.xpose.msra.mxu0 0.0
      %704 = vmatprep.subr.mxu0 0.0
      %705 = vmatpush1.xpose.msra.mxu0 0.0
      %706 = vmatprep.subr.mxu0 0.0
      %707 = vmatpush1.xpose.msra.mxu0 0.0
      %708 = vmatprep.subr.mxu0 0.0
      %709 = vmatpush1.xpose.msra.mxu0 0.0
      %710 = vmatprep.subr.mxu0 0.0
      %711 = vmatpush1.xpose.msra.mxu0 0.0
      %712 = vmatprep.subr.mxu0 0.0
      %713 = vmatpush1.xpose.msra.mxu0 0.0
      %714 = vmatprep.subr.mxu0 0.0
      %715 = vmatpush1.xpose.msra.mxu0 0.0
      %716 = vmatprep.subr.mxu0 0.0
      %717 = vmatpush1.xpose.msra.mxu0 0.0
      %718 = vmatprep.subr.mxu0 0.0
      %719 = vmatpush1.xpose.msra.mxu0 0.0
      %720 = vmatprep.subr.mxu0 0.0
      %721 = vmatpush1.xpose.msra.mxu0 0.0
      %722 = vmatprep.subr.mxu0 0.0
      %723 = vmatpush1.xpose.msra.mxu0 0.0
      %724 = vmatprep.mubr.f32.mxu0 0.0
      %v725 = vand.u32 %v269, 4294901760
      %726 = vmatmul.mubr.f32.gmra.mrb[0].mxu0 %v725
      %v727 = vpop.f32.mrb[0].mxu0
      %v728 = vadd.f32 %v635, %v727
      %v729 = vpop.f32.mrb[0].mxu0
      %730 = vmatprep.mubr.f32.mxu0 0.0
      %v731 = vand.u32 %v272, 4294901760
      %732 = vmatmul.mubr.f32.gmra.mrb[0].mxu0 %v731
      %v733 = vpop.f32.mrb[0].mxu0
      %v734 = vadd.f32 %v643, %v733
      %v735 = vpop.f32.mrb[0].mxu0
      %736 = vmatprep.mubr.f32.mxu0 0.0
      %v737 = vand.u32 %v275, 4294901760
      %738 = vmatmul.mubr.f32.gmra.mrb[0].mxu0 %v737
      %v739 = vpop.f32.mrb[0].mxu0
      %v740 = vadd.f32 %v651, %v739
      %v741 = vpop.f32.mrb[0].mxu0
      %742 = vdwg.mxu0
      %743 = vmatprep.subr.mxu0 0.0
      %v744 = vand.u32 %v278, 4294901760
      %745 = vmatpush1.xpose.msra.mxu0 %v744
      %746 = vmatprep.subr.mxu0 0.0
      %v747 = vand.u32 %v281, 4294901760
      %748 = vmatpush1.xpose.msra.mxu0 %v747
      %749 = vmatprep.subr.mxu0 0.0
      %750 = vmatpush1.xpose.msra.mxu0 0.0
      %751 = vmatprep.subr.mxu0 0.0
      %752 = vmatpush1.xpose.msra.mxu0 0.0
      %753 = vmatprep.subr.mxu0 0.0
      %754 = vmatpush1.xpose.msra.mxu0 0.0
      %755 = vmatprep.subr.mxu0 0.0
      %756 = vmatpush1.xpose.msra.mxu0 0.0
      %757 = vmatprep.subr.mxu0 0.0
      %758 = vmatpush1.xpose.msra.mxu0 0.0
      %759 = vmatprep.subr.mxu0 0.0
      %760 = vmatpush1.xpose.msra.mxu0 0.0
      %761 = vmatprep.subr.mxu0 0.0
      %762 = vmatpush1.xpose.msra.mxu0 0.0
      %763 = vmatprep.subr.mxu0 0.0
      %764 = vmatpush1.xpose.msra.mxu0 0.0
      %765 = vmatprep.subr.mxu0 0.0
      %766 = vmatpush1.xpose.msra.mxu0 0.0
      %767 = vmatprep.subr.mxu0 0.0
      %768 = vmatpush1.xpose.msra.mxu0 0.0
      %769 = vmatprep.subr.mxu0 0.0
      %770 = vmatpush1.xpose.msra.mxu0 0.0
      %771 = vmatprep.subr.mxu0 0.0
      %772 = vmatpush1.xpose.msra.mxu0 0.0
      %773 = vmatprep.subr.mxu0 0.0
      %774 = vmatpush1.xpose.msra.mxu0 0.0
      %775 = vmatprep.subr.mxu0 0.0
      %776 = vmatpush1.xpose.msra.mxu0 0.0
      %777 = vmatprep.subr.mxu0 0.0
      %778 = vmatpush1.xpose.msra.mxu0 0.0
      %779 = vmatprep.subr.mxu0 0.0
      %780 = vmatpush1.xpose.msra.mxu0 0.0
      %781 = vmatprep.subr.mxu0 0.0
      %782 = vmatpush1.xpose.msra.mxu0 0.0
      %783 = vmatprep.subr.mxu0 0.0
      %784 = vmatpush1.xpose.msra.mxu0 0.0
      %785 = vmatprep.subr.mxu0 0.0
      %786 = vmatpush1.xpose.msra.mxu0 0.0
      %787 = vmatprep.subr.mxu0 0.0
      %788 = vmatpush1.xpose.msra.mxu0 0.0
      %789 = vmatprep.subr.mxu0 0.0
      %790 = vmatpush1.xpose.msra.mxu0 0.0
      %791 = vmatprep.subr.mxu0 0.0
      %792 = vmatpush1.xpose.msra.mxu0 0.0
      %793 = vmatprep.subr.mxu0 0.0
      %794 = vmatpush1.xpose.msra.mxu0 0.0
      %795 = vmatprep.subr.mxu0 0.0
      %796 = vmatpush1.xpose.msra.mxu0 0.0
      %797 = vmatprep.subr.mxu0 0.0
      %798 = vmatpush1.xpose.msra.mxu0 0.0
      %799 = vmatprep.subr.mxu0 0.0
      %800 = vmatpush1.xpose.msra.mxu0 0.0
      %801 = vmatprep.subr.mxu0 0.0
      %802 = vmatpush1.xpose.msra.mxu0 0.0
      %803 = vmatprep.subr.mxu0 0.0
      %804 = vmatpush1.xpose.msra.mxu0 0.0
      %805 = vmatprep.subr.mxu0 0.0
      %806 = vmatpush1.xpose.msra.mxu0 0.0
      %807 = vmatprep.subr.mxu0 0.0
      %808 = vmatpush1.xpose.msra.mxu0 0.0
      %809 = vmatprep.mubr.f32.mxu0 0.0
      %v810 = vand.u32 %v269, 4294901760
      %811 = vmatmul.mubr.f32.gmra.mrb[0].mxu0 %v810
      %v812 = vpop.f32.mrb[0].mxu0
      %v813 = vadd.f32 %v728, %v812
      %v814 = vpop.f32.mrb[0].mxu0
      %815 = vmatprep.mubr.f32.mxu0 0.0
      %v816 = vand.u32 %v272, 4294901760
      %817 = vmatmul.mubr.f32.gmra.mrb[0].mxu0 %v816
      %v818 = vpop.f32.mrb[0].mxu0
      %v819 = vadd.f32 %v734, %v818
      %v820 = vpop.f32.mrb[0].mxu0
      %821 = vmatprep.mubr.f32.mxu0 0.0
      %v822 = vand.u32 %v275, 4294901760
      %823 = vmatmul.mubr.f32.gmra.mrb[0].mxu0 %v822
      %v824 = vpop.f32.mrb[0].mxu0
      %v825 = vadd.f32 %v740, %v824
      %v826 = vpop.f32.mrb[0].mxu0
      %827 = vdwg.mxu0
      %v828 = vmul.f32 %v265, %v265
      %v829 = vmul.f32 %v266, %v266
      %v831 = vsel %vm267, 1.0, 0
      %v834 = vsel %vm267, %v828, 0
      %v837 = vsel %vm267, %v829, 0
      %839 = vmatprep.subr.mxu0 0.0
      %v840 = vand.u32 %v834, 4294901760
      %841 = vmatpush1.xpose.msra.mxu0 %v840
      %842 = vmatprep.subr.mxu0 0.0
      %v843 = vand.u32 %v837, 4294901760
      %844 = vmatpush1.xpose.msra.mxu0 %v843
      %845 = vmatprep.subr.mxu0 0.0
      %846 = vmatpush1.xpose.msra.mxu0 0.0
      %847 = vmatprep.subr.mxu0 0.0
      %848 = vmatpush1.xpose.msra.mxu0 0.0
      %849 = vmatprep.subr.mxu0 0.0
      %850 = vmatpush1.xpose.msra.mxu0 0.0
      %851 = vmatprep.subr.mxu0 0.0
      %852 = vmatpush1.xpose.msra.mxu0 0.0
      %853 = vmatprep.subr.mxu0 0.0
      %854 = vmatpush1.xpose.msra.mxu0 0.0
      %855 = vmatprep.subr.mxu0 0.0
      %856 = vmatpush1.xpose.msra.mxu0 0.0
      %857 = vmatprep.subr.mxu0 0.0
      %858 = vmatpush1.xpose.msra.mxu0 0.0
      %859 = vmatprep.subr.mxu0 0.0
      %860 = vmatpush1.xpose.msra.mxu0 0.0
      %861 = vmatprep.subr.mxu0 0.0
      %862 = vmatpush1.xpose.msra.mxu0 0.0
      %863 = vmatprep.subr.mxu0 0.0
      %864 = vmatpush1.xpose.msra.mxu0 0.0
      %865 = vmatprep.subr.mxu0 0.0
      %866 = vmatpush1.xpose.msra.mxu0 0.0
      %867 = vmatprep.subr.mxu0 0.0
      %868 = vmatpush1.xpose.msra.mxu0 0.0
      %869 = vmatprep.subr.mxu0 0.0
      %870 = vmatpush1.xpose.msra.mxu0 0.0
      %871 = vmatprep.subr.mxu0 0.0
      %872 = vmatpush1.xpose.msra.mxu0 0.0
      %873 = vmatprep.subr.mxu0 0.0
      %874 = vmatpush1.xpose.msra.mxu0 0.0
      %875 = vmatprep.subr.mxu0 0.0
      %876 = vmatpush1.xpose.msra.mxu0 0.0
      %877 = vmatprep.subr.mxu0 0.0
      %878 = vmatpush1.xpose.msra.mxu0 0.0
      %879 = vmatprep.subr.mxu0 0.0
      %880 = vmatpush1.xpose.msra.mxu0 0.0
      %881 = vmatprep.subr.mxu0 0.0
      %882 = vmatpush1.xpose.msra.mxu0 0.0
      %883 = vmatprep.subr.mxu0 0.0
      %884 = vmatpush1.xpose.msra.mxu0 0.0
      %885 = vmatprep.subr.mxu0 0.0
      %886 = vmatpush1.xpose.msra.mxu0 0.0
      %887 = vmatprep.subr.mxu0 0.0
      %888 = vmatpush1.xpose.msra.mxu0 0.0
      %889 = vmatprep.subr.mxu0 0.0
      %890 = vmatpush1.xpose.msra.mxu0 0.0
      %891 = vmatprep.subr.mxu0 0.0
      %892 = vmatpush1.xpose.msra.mxu0 0.0
      %893 = vmatprep.subr.mxu0 0.0
      %894 = vmatpush1.xpose.msra.mxu0 0.0
      %895 = vmatprep.subr.mxu0 0.0
      %896 = vmatpush1.xpose.msra.mxu0 0.0
      %897 = vmatprep.subr.mxu0 0.0
      %898 = vmatpush1.xpose.msra.mxu0 0.0
      %899 = vmatprep.subr.mxu0 0.0
      %900 = vmatpush1.xpose.msra.mxu0 0.0
      %901 = vmatprep.subr.mxu0 0.0
      %902 = vmatpush1.xpose.msra.mxu0 0.0
      %903 = vmatprep.subr.mxu0 0.0
      %904 = vmatpush1.xpose.msra.mxu0 0.0
      %905 = vmatprep.mubr.f32.mxu0 0.0
      %v906 = vand.u32 %v831, 4294901760
      %v907 = vsub.f32 %v831, %v906
      %v908 = vand.u32 %v907, 4294901760
      %v909 = vsub.f32 %v907, %v908
      %v910 = vand.u32 %v909, 4294901760
      %911 = vmatmul.mubr.f32.gmra.mrb[0].mxu0 %v910
      %v912 = vpop.f32.mrb[0].mxu0
      %v913 = vadd.f32 0.0, %v912
      %v914 = vpop.f32.mrb[0].mxu0
      %915 = vdwg.mxu0
      %916 = vmatprep.subr.mxu0 0.0
      %v917 = vand.u32 %v834, 4294901760
      %v918 = vsub.f32 %v834, %v917
      %v919 = vand.u32 %v918, 4294901760
      %v920 = vsub.f32 %v918, %v919
      %v921 = vand.u32 %v920, 4294901760
      %922 = vmatpush1.xpose.msra.mxu0 %v921
      %923 = vmatprep.subr.mxu0 0.0
      %v924 = vand.u32 %v837, 4294901760
      %v925 = vsub.f32 %v837, %v924
      %v926 = vand.u32 %v925, 4294901760
      %v927 = vsub.f32 %v925, %v926
      %v928 = vand.u32 %v927, 4294901760
      %929 = vmatpush1.xpose.msra.mxu0 %v928
      %930 = vmatprep.subr.mxu0 0.0
      %931 = vmatpush1.xpose.msra.mxu0 0.0
      %932 = vmatprep.subr.mxu0 0.0
      %933 = vmatpush1.xpose.msra.mxu0 0.0
      %934 = vmatprep.subr.mxu0 0.0
      %935 = vmatpush1.xpose.msra.mxu0 0.0
      %936 = vmatprep.subr.mxu0 0.0
      %937 = vmatpush1.xpose.msra.mxu0 0.0
      %938 = vmatprep.subr.mxu0 0.0
      %939 = vmatpush1.xpose.msra.mxu0 0.0
      %940 = vmatprep.subr.mxu0 0.0
      %941 = vmatpush1.xpose.msra.mxu0 0.0
      %942 = vmatprep.subr.mxu0 0.0
      %943 = vmatpush1.xpose.msra.mxu0 0.0
      %944 = vmatprep.subr.mxu0 0.0
      %945 = vmatpush1.xpose.msra.mxu0 0.0
      %946 = vmatprep.subr.mxu0 0.0
      %947 = vmatpush1.xpose.msra.mxu0 0.0
      %948 = vmatprep.subr.mxu0 0.0
      %949 = vmatpush1.xpose.msra.mxu0 0.0
      %950 = vmatprep.subr.mxu0 0.0
      %951 = vmatpush1.xpose.msra.mxu0 0.0
      %952 = vmatprep.subr.mxu0 0.0
      %953 = vmatpush1.xpose.msra.mxu0 0.0
      %954 = vmatprep.subr.mxu0 0.0
      %955 = vmatpush1.xpose.msra.mxu0 0.0
      %956 = vmatprep.subr.mxu0 0.0
      %957 = vmatpush1.xpose.msra.mxu0 0.0
      %958 = vmatprep.subr.mxu0 0.0
      %959 = vmatpush1.xpose.msra.mxu0 0.0
      %960 = vmatprep.subr.mxu0 0.0
      %961 = vmatpush1.xpose.msra.mxu0 0.0
      %962 = vmatprep.subr.mxu0 0.0
      %963 = vmatpush1.xpose.msra.mxu0 0.0
      %964 = vmatprep.subr.mxu0 0.0
      %965 = vmatpush1.xpose.msra.mxu0 0.0
      %966 = vmatprep.subr.mxu0 0.0
      %967 = vmatpush1.xpose.msra.mxu0 0.0
      %968 = vmatprep.subr.mxu0 0.0
      %969 = vmatpush1.xpose.msra.mxu0 0.0
      %970 = vmatprep.subr.mxu0 0.0
      %971 = vmatpush1.xpose.msra.mxu0 0.0
      %972 = vmatprep.subr.mxu0 0.0
      %973 = vmatpush1.xpose.msra.mxu0 0.0
      %974 = vmatprep.subr.mxu0 0.0
      %975 = vmatpush1.xpose.msra.mxu0 0.0
      %976 = vmatprep.subr.mxu0 0.0
      %977 = vmatpush1.xpose.msra.mxu0 0.0
      %978 = vmatprep.subr.mxu0 0.0
      %979 = vmatpush1.xpose.msra.mxu0 0.0
      %980 = vmatprep.subr.mxu0 0.0
      %981 = vmatpush1.xpose.msra.mxu0 0.0
      %982 = vmatprep.subr.mxu0 0.0
      %983 = vmatpush1.xpose.msra.mxu0 0.0
      %984 = vmatprep.subr.mxu0 0.0
      %985 = vmatpush1.xpose.msra.mxu0 0.0
      %986 = vmatprep.subr.mxu0 0.0
      %987 = vmatpush1.xpose.msra.mxu0 0.0
      %988 = vmatprep.subr.mxu0 0.0
      %989 = vmatpush1.xpose.msra.mxu0 0.0
      %990 = vmatprep.mubr.f32.mxu0 0.0
      %v991 = vand.u32 %v831, 4294901760
      %992 = vmatmul.mubr.f32.gmra.mrb[0].mxu0 %v991
      %v993 = vpop.f32.mrb[0].mxu0
      %v994 = vadd.f32 %v913, %v993
      %v995 = vpop.f32.mrb[0].mxu0
      %996 = vdwg.mxu0
      %997 = vmatprep.subr.mxu0 0.0
      %v998 = vand.u32 %v834, 4294901760
      %v999 = vsub.f32 %v834, %v998
      %1000 = vmatpush1.xpose.msra.mxu0 %v999
      %1001 = vmatprep.subr.mxu0 0.0
      %v1002 = vand.u32 %v837, 4294901760
      %v1003 = vsub.f32 %v837, %v1002
      %1004 = vmatpush1.xpose.msra.mxu0 %v1003
      %1005 = vmatprep.subr.mxu0 0.0
      %1006 = vmatpush1.xpose.msra.mxu0 0.0
      %1007 = vmatprep.subr.mxu0 0.0
      %1008 = vmatpush1.xpose.msra.mxu0 0.0
      %1009 = vmatprep.subr.mxu0 0.0
      %1010 = vmatpush1.xpose.msra.mxu0 0.0
      %1011 = vmatprep.subr.mxu0 0.0
      %1012 = vmatpush1.xpose.msra.mxu0 0.0
      %1013 = vmatprep.subr.mxu0 0.0
      %1014 = vmatpush1.xpose.msra.mxu0 0.0
      %1015 = vmatprep.subr.mxu0 0.0
      %1016 = vmatpush1.xpose.msra.mxu0 0.0
      %1017 = vmatprep.subr.mxu0 0.0
      %1018 = vmatpush1.xpose.msra.mxu0 0.0
      %1019 = vmatprep.subr.mxu0 0.0
      %1020 = vmatpush1.xpose.msra.mxu0 0.0
      %1021 = vmatprep.subr.mxu0 0.0
      %1022 = vmatpush1.xpose.msra.mxu0 0.0
      %1023 = vmatprep.subr.mxu0 0.0
      %1024 = vmatpush1.xpose.msra.mxu0 0.0
      %1025 = vmatprep.subr.mxu0 0.0
      %1026 = vmatpush1.xpose.msra.mxu0 0.0
      %1027 = vmatprep.subr.mxu0 0.0
      %1028 = vmatpush1.xpose.msra.mxu0 0.0
      %1029 = vmatprep.subr.mxu0 0.0
      %1030 = vmatpush1.xpose.msra.mxu0 0.0
      %1031 = vmatprep.subr.mxu0 0.0
      %1032 = vmatpush1.xpose.msra.mxu0 0.0
      %1033 = vmatprep.subr.mxu0 0.0
      %1034 = vmatpush1.xpose.msra.mxu0 0.0
      %1035 = vmatprep.subr.mxu0 0.0
      %1036 = vmatpush1.xpose.msra.mxu0 0.0
      %1037 = vmatprep.subr.mxu0 0.0
      %1038 = vmatpush1.xpose.msra.mxu0 0.0
      %1039 = vmatprep.subr.mxu0 0.0
      %1040 = vmatpush1.xpose.msra.mxu0 0.0
      %1041 = vmatprep.subr.mxu0 0.0
      %1042 = vmatpush1.xpose.msra.mxu0 0.0
      %1043 = vmatprep.subr.mxu0 0.0
      %1044 = vmatpush1.xpose.msra.mxu0 0.0
      %1045 = vmatprep.subr.mxu0 0.0
      %1046 = vmatpush1.xpose.msra.mxu0 0.0
      %1047 = vmatprep.subr.mxu0 0.0
      %1048 = vmatpush1.xpose.msra.mxu0 0.0
      %1049 = vmatprep.subr.mxu0 0.0
      %1050 = vmatpush1.xpose.msra.mxu0 0.0
      %1051 = vmatprep.subr.mxu0 0.0
      %1052 = vmatpush1.xpose.msra.mxu0 0.0
      %1053 = vmatprep.subr.mxu0 0.0
      %1054 = vmatpush1.xpose.msra.mxu0 0.0
      %1055 = vmatprep.subr.mxu0 0.0
      %1056 = vmatpush1.xpose.msra.mxu0 0.0
      %1057 = vmatprep.subr.mxu0 0.0
      %1058 = vmatpush1.xpose.msra.mxu0 0.0
      %1059 = vmatprep.subr.mxu0 0.0
      %1060 = vmatpush1.xpose.msra.mxu0 0.0
      %1061 = vmatprep.subr.mxu0 0.0
      %1062 = vmatpush1.xpose.msra.mxu0 0.0
      %1063 = vmatprep.subr.mxu0 0.0
      %1064 = vmatpush1.xpose.msra.mxu0 0.0
      %1065 = vmatprep.mubr.f32.mxu0 0.0
      %v1066 = vand.u32 %v831, 4294901760
      %v1067 = vsub.f32 %v831, %v1066
      %1068 = vmatmul.mubr.f32.gmra.mrb[0].mxu0 %v1067
      %v1069 = vpop.f32.mrb[0].mxu0
      %v1070 = vadd.f32 %v994, %v1069
      %v1071 = vpop.f32.mrb[0].mxu0
      %1072 = vdwg.mxu0
      %1073 = vmatprep.subr.mxu0 0.0
      %v1074 = vand.u32 %v834, 4294901760
      %1075 = vmatpush1.xpose.msra.mxu0 %v1074
      %1076 = vmatprep.subr.mxu0 0.0
      %v1077 = vand.u32 %v837, 4294901760
      %1078 = vmatpush1.xpose.msra.mxu0 %v1077
      %1079 = vmatprep.subr.mxu0 0.0
      %1080 = vmatpush1.xpose.msra.mxu0 0.0
      %1081 = vmatprep.subr.mxu0 0.0
      %1082 = vmatpush1.xpose.msra.mxu0 0.0
      %1083 = vmatprep.subr.mxu0 0.0
      %1084 = vmatpush1.xpose.msra.mxu0 0.0
      %1085 = vmatprep.subr.mxu0 0.0
      %1086 = vmatpush1.xpose.msra.mxu0 0.0
      %1087 = vmatprep.subr.mxu0 0.0
      %1088 = vmatpush1.xpose.msra.mxu0 0.0
      %1089 = vmatprep.subr.mxu0 0.0
      %1090 = vmatpush1.xpose.msra.mxu0 0.0
      %1091 = vmatprep.subr.mxu0 0.0
      %1092 = vmatpush1.xpose.msra.mxu0 0.0
      %1093 = vmatprep.subr.mxu0 0.0
      %1094 = vmatpush1.xpose.msra.mxu0 0.0
      %1095 = vmatprep.subr.mxu0 0.0
      %1096 = vmatpush1.xpose.msra.mxu0 0.0
      %1097 = vmatprep.subr.mxu0 0.0
      %1098 = vmatpush1.xpose.msra.mxu0 0.0
      %1099 = vmatprep.subr.mxu0 0.0
      %1100 = vmatpush1.xpose.msra.mxu0 0.0
      %1101 = vmatprep.subr.mxu0 0.0
      %1102 = vmatpush1.xpose.msra.mxu0 0.0
      %1103 = vmatprep.subr.mxu0 0.0
      %1104 = vmatpush1.xpose.msra.mxu0 0.0
      %1105 = vmatprep.subr.mxu0 0.0
      %1106 = vmatpush1.xpose.msra.mxu0 0.0
      %1107 = vmatprep.subr.mxu0 0.0
      %1108 = vmatpush1.xpose.msra.mxu0 0.0
      %1109 = vmatprep.subr.mxu0 0.0
      %1110 = vmatpush1.xpose.msra.mxu0 0.0
      %1111 = vmatprep.subr.mxu0 0.0
      %1112 = vmatpush1.xpose.msra.mxu0 0.0
      %1113 = vmatprep.subr.mxu0 0.0
      %1114 = vmatpush1.xpose.msra.mxu0 0.0
      %1115 = vmatprep.subr.mxu0 0.0
      %1116 = vmatpush1.xpose.msra.mxu0 0.0
      %1117 = vmatprep.subr.mxu0 0.0
      %1118 = vmatpush1.xpose.msra.mxu0 0.0
      %1119 = vmatprep.subr.mxu0 0.0
      %1120 = vmatpush1.xpose.msra.mxu0 0.0
      %1121 = vmatprep.subr.mxu0 0.0
      %1122 = vmatpush1.xpose.msra.mxu0 0.0
      %1123 = vmatprep.subr.mxu0 0.0
      %1124 = vmatpush1.xpose.msra.mxu0 0.0
      %1125 = vmatprep.subr.mxu0 0.0
      %1126 = vmatpush1.xpose.msra.mxu0 0.0
      %1127 = vmatprep.subr.mxu0 0.0
      %1128 = vmatpush1.xpose.msra.mxu0 0.0
      %1129 = vmatprep.subr.mxu0 0.0
      %1130 = vmatpush1.xpose.msra.mxu0 0.0
      %1131 = vmatprep.subr.mxu0 0.0
      %1132 = vmatpush1.xpose.msra.mxu0 0.0
      %1133 = vmatprep.subr.mxu0 0.0
      %1134 = vmatpush1.xpose.msra.mxu0 0.0
      %1135 = vmatprep.subr.mxu0 0.0
      %1136 = vmatpush1.xpose.msra.mxu0 0.0
      %1137 = vmatprep.subr.mxu0 0.0
      %1138 = vmatpush1.xpose.msra.mxu0 0.0
      %1139 = vmatprep.mubr.f32.mxu0 0.0
      %v1140 = vand.u32 %v831, 4294901760
      %v1141 = vsub.f32 %v831, %v1140
      %v1142 = vand.u32 %v1141, 4294901760
      %1143 = vmatmul.mubr.f32.gmra.mrb[0].mxu0 %v1142
      %v1144 = vpop.f32.mrb[0].mxu0
      %v1145 = vadd.f32 %v1070, %v1144
      %v1146 = vpop.f32.mrb[0].mxu0
      %1147 = vdwg.mxu0
      %1148 = vmatprep.subr.mxu0 0.0
      %v1149 = vand.u32 %v834, 4294901760
      %v1150 = vsub.f32 %v834, %v1149
      %v1151 = vand.u32 %v1150, 4294901760
      %1152 = vmatpush1.xpose.msra.mxu0 %v1151
      %1153 = vmatprep.subr.mxu0 0.0
      %v1154 = vand.u32 %v837, 4294901760
      %v1155 = vsub.f32 %v837, %v1154
      %v1156 = vand.u32 %v1155, 4294901760
      %1157 = vmatpush1.xpose.msra.mxu0 %v1156
      %1158 = vmatprep.subr.mxu0 0.0
      %1159 = vmatpush1.xpose.msra.mxu0 0.0
      %1160 = vmatprep.subr.mxu0 0.0
      %1161 = vmatpush1.xpose.msra.mxu0 0.0
      %1162 = vmatprep.subr.mxu0 0.0
      %1163 = vmatpush1.xpose.msra.mxu0 0.0
      %1164 = vmatprep.subr.mxu0 0.0
      %1165 = vmatpush1.xpose.msra.mxu0 0.0
      %1166 = vmatprep.subr.mxu0 0.0
      %1167 = vmatpush1.xpose.msra.mxu0 0.0
      %1168 = vmatprep.subr.mxu0 0.0
      %1169 = vmatpush1.xpose.msra.mxu0 0.0
      %1170 = vmatprep.subr.mxu0 0.0
      %1171 = vmatpush1.xpose.msra.mxu0 0.0
      %1172 = vmatprep.subr.mxu0 0.0
      %1173 = vmatpush1.xpose.msra.mxu0 0.0
      %1174 = vmatprep.subr.mxu0 0.0
      %1175 = vmatpush1.xpose.msra.mxu0 0.0
      %1176 = vmatprep.subr.mxu0 0.0
      %1177 = vmatpush1.xpose.msra.mxu0 0.0
      %1178 = vmatprep.subr.mxu0 0.0
      %1179 = vmatpush1.xpose.msra.mxu0 0.0
      %1180 = vmatprep.subr.mxu0 0.0
      %1181 = vmatpush1.xpose.msra.mxu0 0.0
      %1182 = vmatprep.subr.mxu0 0.0
      %1183 = vmatpush1.xpose.msra.mxu0 0.0
      %1184 = vmatprep.subr.mxu0 0.0
      %1185 = vmatpush1.xpose.msra.mxu0 0.0
      %1186 = vmatprep.subr.mxu0 0.0
      %1187 = vmatpush1.xpose.msra.mxu0 0.0
      %1188 = vmatprep.subr.mxu0 0.0
      %1189 = vmatpush1.xpose.msra.mxu0 0.0
      %1190 = vmatprep.subr.mxu0 0.0
      %1191 = vmatpush1.xpose.msra.mxu0 0.0
      %1192 = vmatprep.subr.mxu0 0.0
      %1193 = vmatpush1.xpose.msra.mxu0 0.0
      %1194 = vmatprep.subr.mxu0 0.0
      %1195 = vmatpush1.xpose.msra.mxu0 0.0
      %1196 = vmatprep.subr.mxu0 0.0
      %1197 = vmatpush1.xpose.msra.mxu0 0.0
      %1198 = vmatprep.subr.mxu0 0.0
      %1199 = vmatpush1.xpose.msra.mxu0 0.0
      %1200 = vmatprep.subr.mxu0 0.0
      %1201 = vmatpush1.xpose.msra.mxu0 0.0
      %1202 = vmatprep.subr.mxu0 0.0
      %1203 = vmatpush1.xpose.msra.mxu0 0.0
      %1204 = vmatprep.subr.mxu0 0.0
      %1205 = vmatpush1.xpose.msra.mxu0 0.0
      %1206 = vmatprep.subr.mxu0 0.0
      %1207 = vmatpush1.xpose.msra.mxu0 0.0
      %1208 = vmatprep.subr.mxu0 0.0
      %1209 = vmatpush1.xpose.msra.mxu0 0.0
      %1210 = vmatprep.subr.mxu0 0.0
      %1211 = vmatpush1.xpose.msra.mxu0 0.0
      %1212 = vmatprep.subr.mxu0 0.0
      %1213 = vmatpush1.xpose.msra.mxu0 0.0
      %1214 = vmatprep.subr.mxu0 0.0
      %1215 = vmatpush1.xpose.msra.mxu0 0.0
      %1216 = vmatprep.subr.mxu0 0.0
      %1217 = vmatpush1.xpose.msra.mxu0 0.0
      %1218 = vmatprep.mubr.f32.mxu0 0.0
      %v1219 = vand.u32 %v831, 4294901760
      %1220 = vmatmul.mubr.f32.gmra.mrb[0].mxu0 %v1219
      %v1221 = vpop.f32.mrb[0].mxu0
      %v1222 = vadd.f32 %v1145, %v1221
      %v1223 = vpop.f32.mrb[0].mxu0
      %1224 = vdwg.mxu0
      %1225 = vmatprep.subr.mxu0 0.0
      %v1226 = vand.u32 %v834, 4294901760
      %1227 = vmatpush1.xpose.msra.mxu0 %v1226
      %1228 = vmatprep.subr.mxu0 0.0
      %v1229 = vand.u32 %v837, 4294901760
      %1230 = vmatpush1.xpose.msra.mxu0 %v1229
      %1231 = vmatprep.subr.mxu0 0.0
      %1232 = vmatpush1.xpose.msra.mxu0 0.0
      %1233 = vmatprep.subr.mxu0 0.0
      %1234 = vmatpush1.xpose.msra.mxu0 0.0
      %1235 = vmatprep.subr.mxu0 0.0
      %1236 = vmatpush1.xpose.msra.mxu0 0.0
      %1237 = vmatprep.subr.mxu0 0.0
      %1238 = vmatpush1.xpose.msra.mxu0 0.0
      %1239 = vmatprep.subr.mxu0 0.0
      %1240 = vmatpush1.xpose.msra.mxu0 0.0
      %1241 = vmatprep.subr.mxu0 0.0
      %1242 = vmatpush1.xpose.msra.mxu0 0.0
      %1243 = vmatprep.subr.mxu0 0.0
      %1244 = vmatpush1.xpose.msra.mxu0 0.0
      %1245 = vmatprep.subr.mxu0 0.0
      %1246 = vmatpush1.xpose.msra.mxu0 0.0
      %1247 = vmatprep.subr.mxu0 0.0
      %1248 = vmatpush1.xpose.msra.mxu0 0.0
      %1249 = vmatprep.subr.mxu0 0.0
      %1250 = vmatpush1.xpose.msra.mxu0 0.0
      %1251 = vmatprep.subr.mxu0 0.0
      %1252 = vmatpush1.xpose.msra.mxu0 0.0
      %1253 = vmatprep.subr.mxu0 0.0
      %1254 = vmatpush1.xpose.msra.mxu0 0.0
      %1255 = vmatprep.subr.mxu0 0.0
      %1256 = vmatpush1.xpose.msra.mxu0 0.0
      %1257 = vmatprep.subr.mxu0 0.0
      %1258 = vmatpush1.xpose.msra.mxu0 0.0
      %1259 = vmatprep.subr.mxu0 0.0
      %1260 = vmatpush1.xpose.msra.mxu0 0.0
      %1261 = vmatprep.subr.mxu0 0.0
      %1262 = vmatpush1.xpose.msra.mxu0 0.0
      %1263 = vmatprep.subr.mxu0 0.0
      %1264 = vmatpush1.xpose.msra.mxu0 0.0
      %1265 = vmatprep.subr.mxu0 0.0
      %1266 = vmatpush1.xpose.msra.mxu0 0.0
      %1267 = vmatprep.subr.mxu0 0.0
      %1268 = vmatpush1.xpose.msra.mxu0 0.0
      %1269 = vmatprep.subr.mxu0 0.0
      %1270 = vmatpush1.xpose.msra.mxu0 0.0
      %1271 = vmatprep.subr.mxu0 0.0
      %1272 = vmatpush1.xpose.msra.mxu0 0.0
      %1273 = vmatprep.subr.mxu0 0.0
      %1274 = vmatpush1.xpose.msra.mxu0 0.0
      %1275 = vmatprep.subr.mxu0 0.0
      %1276 = vmatpush1.xpose.msra.mxu0 0.0
      %1277 = vmatprep.subr.mxu0 0.0
      %1278 = vmatpush1.xpose.msra.mxu0 0.0
      %1279 = vmatprep.subr.mxu0 0.0
      %1280 = vmatpush1.xpose.msra.mxu0 0.0
      %1281 = vmatprep.subr.mxu0 0.0
      %1282 = vmatpush1.xpose.msra.mxu0 0.0
      %1283 = vmatprep.subr.mxu0 0.0
      %1284 = vmatpush1.xpose.msra.mxu0 0.0
      %1285 = vmatprep.subr.mxu0 0.0
      %1286 = vmatpush1.xpose.msra.mxu0 0.0
      %1287 = vmatprep.subr.mxu0 0.0
      %1288 = vmatpush1.xpose.msra.mxu0 0.0
      %1289 = vmatprep.subr.mxu0 0.0
      %1290 = vmatpush1.xpose.msra.mxu0 0.0
      %1291 = vmatprep.mubr.f32.mxu0 0.0
      %v1292 = vand.u32 %v831, 4294901760
      %1293 = vmatmul.mubr.f32.gmra.mrb[0].mxu0 %v1292
      %v1294 = vpop.f32.mrb[0].mxu0
      %v1295 = vadd.f32 %v1222, %v1294
      %v1296 = vpop.f32.mrb[0].mxu0
      %1297 = vdwg.mxu0
      %v1298 = vmax.f32 %v1295, 1e-24
      %v1299 = vrsqrt.pop %v1298
      %v1300 = vlaneseq
      %v1301 = vshrl.u32 %v1300, 7
      %v1302 = vsub.s32 0, %v1301
      %v1303 = vrot.slane %v1299, %v1302
      %v1304 = vmul.f32 %v813, %v1303
      %v1305 = vmul.f32 %v819, %v1303
      %v1306 = vmul.f32 %v825, %v1303
      %vm1307 = vcmask 130048
      %1308 = vst.msk [vmem:[%s246] sm:$0xff] %vm1307, %v1304
      %1309 = vst.msk [vmem:[%s246 + $0x8] sm:$0xff] %vm1307, %v1305
      %1310 = vst.msk [vmem:[%s246 + $0x10] sm:$0xff] %vm1307, %v1306
      %1311 = vst.msk [vmem:[%s251] sm:$0xff] %vm1307, %v813
      %1312 = vst.msk [vmem:[%s251 + $0x8] sm:$0xff] %vm1307, %v819
      %1313 = vst.msk [vmem:[%s251 + $0x10] sm:$0xff] %vm1307, %v825
      %v1314 = vsel %vm1307, %v1304, -inf
      %1315 = vmax.xlane.f32.xlu0 %v1314
      %v1316 = vpop.xlane.xlu0 %1315
      %v1317 = vsel %vm1307, %v1305, -inf
      %1318 = vmax.xlane.f32.xlu0 %v1317
      %v1319 = vpop.xlane.xlu0 %1318
      %v1320 = vsel %vm1307, %v1306, -inf
      %1321 = vmax.xlane.f32.xlu0 %v1320
      %v1322 = vpop.xlane.xlu0 %1321
      %vm1323 = vcmask 7168
      %1324 = vst.msk [vmem:[%s256] sm:$0xff] %vm1323, %v1316
      %1325 = vst.msk [vmem:[%s256 + $0x8] sm:$0xff] %vm1323, %v1319
      %1326 = vst.msk [vmem:[%s256 + $0x10] sm:$0xff] %vm1323, %v1322
      %v1327 = vsel %vm1307, %v813, -inf
      %1328 = vmax.xlane.f32.xlu0 %v1327
      %v1329 = vpop.xlane.xlu0 %1328
      %v1330 = vsel %vm1307, %v819, -inf
      %1331 = vmax.xlane.f32.xlu0 %v1330
      %v1332 = vpop.xlane.xlu0 %1331
      %v1333 = vsel %vm1307, %v825, -inf
      %1334 = vmax.xlane.f32.xlu0 %v1333
      %v1335 = vpop.xlane.xlu0 %1334
      %1336 = vst.msk [vmem:[%s261] sm:$0xff] %vm1323, %v1329
      %1337 = vst.msk [vmem:[%s261 + $0x8] sm:$0xff] %vm1323, %v1332
      %1338 = vst.msk [vmem:[%s261 + $0x10] sm:$0xff] %vm1323, %v1335
      %p1339 = scmp.lt.s32.totalorder %s17, 1
      %s1340 = scalar_select %p1339, %s17, 1
      %s1341 = smul.addr %s1340, 3
      %s1342 = smul.addr %s1341, 8
      %s1343 = scalar_lea.vmem %s2, %s1342
      %p1344 = scmp.lt.s32.totalorder %s17, 1
      %s1345 = scalar_select %p1344, %s17, 1
      %s1346 = smul.addr %s1345, 3
      %s1347 = smul.addr %s1346, 8
      %s1348 = scalar_lea.vmem %s3, %s1347
      %p1349 = scmp.lt.s32.totalorder %s17, 1
      %s1350 = scalar_select %p1349, %s17, 1
      %s1351 = smul.addr %s1350, 3
      %s1352 = smul.addr %s1351, 8
      %s1353 = scalar_lea.vmem %s4, %s1352
      %p1354 = scmp.lt.s32.totalorder %s17, 1
      %s1355 = scalar_select %p1354, %s17, 1
      %s1356 = smul.addr %s1355, 3
      %s1357 = smul.addr %s1356, 8
      %s1358 = scalar_lea.vmem %s5, %s1357
      // Predicated region
      $region29: #{tpu_custom_call.1} parent=27 // pred_check
        %p1359 = pneg %p82
      $region30: #{tpu_custom_call.1} parent=27 // pred_check_branch
        %1361 = sbr.rel (%p1359) target = $region32
      $region31: #{tpu_custom_call.1} parent=27 // pred_region
        _
      $region32: #{tpu_custom_call.1} parent=27 // pred_fallthru
        _
      // Predicated region
      $region33: #{tpu_custom_call.1} parent=27 // pred_check
        %p1362 = pneg %p108
      $region34: #{tpu_custom_call.1} parent=27 // pred_check_branch
        %1364 = sbr.rel (%p1362) target = $region36
      $region35: #{tpu_custom_call.1} parent=27 // pred_region
        _
      $region36: #{tpu_custom_call.1} parent=27 // pred_fallthru
        _
      // Predicated region
      $region37: #{tpu_custom_call.1} parent=27 // pred_check
        %p1365 = pneg %p134
      $region38: #{tpu_custom_call.1} parent=27 // pred_check_branch
        %1367 = sbr.rel (%p1365) target = $region40
      $region39: #{tpu_custom_call.1} parent=27 // pred_region
        _
      $region40: #{tpu_custom_call.1} parent=27 // pred_fallthru
        _
      // Predicated region
      $region41: #{tpu_custom_call.1} parent=27 // pred_check
        %p1368 = pneg %p160
      $region42: #{tpu_custom_call.1} parent=27 // pred_check_branch
        %1370 = sbr.rel (%p1368) target = $region44
      $region43: #{tpu_custom_call.1} parent=27 // pred_region
        _
      $region44: #{tpu_custom_call.1} parent=27 // pred_fallthru
        _
    $region28: #{tpu_custom_call.1} parent=5 // pred_fallthru
      _
    %p1371 = scmp.le.s32.totalorder 2, %s12
    // Predicated region
    $region45: #{tpu_custom_call.1} parent=5 // pred_check
      %p1372 = pneg %p1371
    $region46: #{tpu_custom_call.1} parent=5 // pred_check_branch
      %1374 = sbr.rel (%p1372) target = $region48
    $region47: #{tpu_custom_call.1} parent=5 // pred_region
      %s1375 = ssub.s32 %s12, 2
      // Predicated region
      $region49: #{tpu_custom_call.1} parent=47 // pred_check
        %p1376 = pneg %p88
      $region50: #{tpu_custom_call.1} parent=47 // pred_check_branch
        %1378 = sbr.rel (%p1376) target = $region52
      $region51: #{tpu_custom_call.1} parent=47 // pred_region
        %p1379 = scmp.lt.s32.totalorder %s18, 1
        %s1380 = scalar_select %p1379, %s18, 1
        %s1381 = smul.addr %s1380, 3
        %s1382 = smul.addr %s1381, 8
        %s1383 = scalar_lea.vmem %s2, %s1382
      $region52: #{tpu_custom_call.1} parent=47 // pred_fallthru
        _
      // Predicated region
      $region53: #{tpu_custom_call.1} parent=47 // pred_check
        %p1384 = pneg %p114
      $region54: #{tpu_custom_call.1} parent=47 // pred_check_branch
        %1386 = sbr.rel (%p1384) target = $region56
      $region55: #{tpu_custom_call.1} parent=47 // pred_region
        %p1387 = scmp.lt.s32.totalorder %s18, 1
        %s1388 = scalar_select %p1387, %s18, 1
        %s1389 = smul.addr %s1388, 3
        %s1390 = smul.addr %s1389, 8
        %s1391 = scalar_lea.vmem %s3, %s1390
      $region56: #{tpu_custom_call.1} parent=47 // pred_fallthru
        _
      // Predicated region
      $region57: #{tpu_custom_call.1} parent=47 // pred_check
        %p1392 = pneg %p140
      $region58: #{tpu_custom_call.1} parent=47 // pred_check_branch
        %1394 = sbr.rel (%p1392) target = $region60
      $region59: #{tpu_custom_call.1} parent=47 // pred_region
        %p1395 = scmp.lt.s32.totalorder %s18, 1
        %s1396 = scalar_select %p1395, %s18, 1
        %s1397 = smul.addr %s1396, 3
        %s1398 = smul.addr %s1397, 8
        %s1399 = scalar_lea.vmem %s4, %s1398
      $region60: #{tpu_custom_call.1} parent=47 // pred_fallthru
        _
      // Predicated region
      $region61: #{tpu_custom_call.1} parent=47 // pred_check
        %p1400 = pneg %p166
      $region62: #{tpu_custom_call.1} parent=47 // pred_check_branch
        %1402 = sbr.rel (%p1400) target = $region64
      $region63: #{tpu_custom_call.1} parent=47 // pred_region
        %p1403 = scmp.lt.s32.totalorder %s18, 1
        %s1404 = scalar_select %p1403, %s18, 1
        %s1405 = smul.addr %s1404, 3
        %s1406 = smul.addr %s1405, 8
        %s1407 = scalar_lea.vmem %s5, %s1406
      $region64: #{tpu_custom_call.1} parent=47 // pred_fallthru
        _
    $region48: #{tpu_custom_call.1} parent=5 // pred_fallthru
      _
  $region6: #{tpu_custom_call.1} parent=0 // loop_footer
    %s16 = sadd.s32 1, %s12
  $region7: #{tpu_custom_call.1} parent=0 // loop_footer_branch
    %11 = sbr.rel target = $region3
  $region8: #{tpu_custom_call.1} parent=0 // loop_exit
    _

</llo_original>
